<compile_context>
chip_gen: v7x
topology: tpu7x:2x2x1
jax: 0.10.0
libtpu: 0.0.40
codegen_flags: <defaults>
</compile_context>

<pallas_src>
import functools

import jax
import jax.numpy as jnp
from jax.experimental import pallas as pl
from jax.experimental.pallas import tpu as pltpu


def _cdiv(a: int, b: int) -> int:
    return -(-a // b)


def _round_up(v: int, m: int) -> int:
    return _cdiv(v, m) * m


def _pick_tile(dim: int, desired: int, granule: int, mxu: int = 0) -> int:
    """Tile <= desired covering `dim` with at most one granule of padding,
    preferring MXU-width (256) multiples when that costs no extra padding."""
    desired = max(granule, _round_up(desired, granule))
    if dim <= desired:
        return _round_up(dim, granule)
    steps = _cdiv(dim, desired)
    t = _round_up(_cdiv(dim, steps), granule)
    if mxu and t % mxu:
        t_down = (t // mxu) * mxu
        if t_down >= mxu and _cdiv(dim, t_down) * t_down <= _cdiv(dim, t) * t:
            t = t_down
    return t


def _pad2(a, rows, cols):
    return jnp.pad(a, ((0, rows - a.shape[0]), (0, cols - a.shape[1])))


# --------------------------------------------------------------------------- #
# Kernel 1: fused linear for the default config (no mask needed).
#   out = gamma * (x @ W^T) + (1 - gamma) * (xa @ B) + bias,   xa = x @ A
# Grid: (M/tm, N/tn, K/tk), K innermost (reduction).  r padded to 128 lanes.
# --------------------------------------------------------------------------- #
def _fused_lowrank_linear_kernel(gamma_ref, x_ref, wt_ref, xa_ref, b_ref,
                                 bias_ref, o_ref, acc_ref):
    k = pl.program_id(2)

    @pl.when(k == 0)
    def _():
        acc_ref[...] = jnp.zeros_like(acc_ref)

    acc_ref[...] += jnp.dot(x_ref[...], wt_ref[...],
                            preferred_element_type=jnp.float32)

    @pl.when(k == pl.num_programs(2) - 1)
    def _():
        gamma = gamma_ref[0]
        low = jnp.dot(xa_ref[...], b_ref[...],
                      preferred_element_type=jnp.float32)
        o_ref[...] = (gamma * acc_ref[...] + (1.0 - gamma) * low
                      + bias_ref[...].astype(jnp.float32)).astype(o_ref.dtype)


# --------------------------------------------------------------------------- #
# Kernel 2: fused masked linear (small M-tile count): blend + mask select is
# applied to the (tk, tn) weight tile inside the K loop (no W_eff HBM round
# trip).  low-rank tile is recomputed from A/B blocks (r padded to 128).
# --------------------------------------------------------------------------- #
def _fused_masked_linear_kernel(gamma_ref, x_ref, wt_ref, maskt_ref, a_ref,
                                b_ref, bias_ref, o_ref, acc_ref, *,
                                w_zero, gamma_all_apply):
    k = pl.program_id(2)

    @pl.when(k == 0)
    def _():
        acc_ref[...] = jnp.zeros_like(acc_ref)

    gamma = gamma_ref[0]
    low = jnp.dot(a_ref[...], b_ref[...], preferred_element_type=jnp.float32)
    combined = gamma * wt_ref[...].astype(jnp.float32) + (1.0 - gamma) * low
    keep = maskt_ref[...] != 0
    if gamma_all_apply:
        other = jnp.zeros_like(combined) if w_zero else combined
    else:
        other = low
    eff = jnp.where(keep, combined, other).astype(x_ref.dtype)

    acc_ref[...] += jnp.dot(x_ref[...], eff, preferred_element_type=jnp.float32)

    @pl.when(k == pl.num_programs(2) - 1)
    def _():
        o_ref[...] = (acc_ref[...]
                      + bias_ref[...].astype(jnp.float32)).astype(o_ref.dtype)


# --------------------------------------------------------------------------- #
# Kernel 3: build the effective weight (transposed, (K, N)) ONCE (many M tiles).
# The rank-r product is computed per tile from A/B blocks; output is emitted in
# the compute dtype (bf16 when requested).
# Grid: (K/tk, N/tn).
# --------------------------------------------------------------------------- #
def _build_weff_kernel(gamma_ref, wt_ref, maskt_ref, a_ref, b_ref, weff_ref, *,
                       w_zero, gamma_all_apply):
    gamma = gamma_ref[0]
    low = jnp.dot(a_ref[...], b_ref[...], preferred_element_type=jnp.float32)
    combined = gamma * wt_ref[...].astype(jnp.float32) + (1.0 - gamma) * low
    keep = maskt_ref[...] != 0
    if gamma_all_apply:
        other = jnp.zeros_like(combined) if w_zero else combined
    else:
        other = low
    weff_ref[...] = jnp.where(keep, combined, other).astype(weff_ref.dtype)


# --------------------------------------------------------------------------- #
# Kernel 4: plain tiled matmul + bias:  out = x @ Weff^T + bias
# Grid: (M/tm, N/tn, K/tk), K innermost (reduction).
# --------------------------------------------------------------------------- #
def _matmul_bias_kernel(x_ref, wt_ref, bias_ref, o_ref, acc_ref):
    k = pl.program_id(2)

    @pl.when(k == 0)
    def _():
        acc_ref[...] = jnp.zeros_like(acc_ref)

    acc_ref[...] += jnp.dot(x_ref[...], wt_ref[...],
                            preferred_element_type=jnp.float32)

    @pl.when(k == pl.num_programs(2) - 1)
    def _():
        o_ref[...] = (acc_ref[...]
                      + bias_ref[...].astype(jnp.float32)).astype(o_ref.dtype)


# --------------------------------------------------------------------------- #
# Wrapper
# --------------------------------------------------------------------------- #
def hybrid_sparse_linear(x, weight, mask, matrix_A, matrix_B, gamma, bias=None,
                         *, w_zero=False, gamma_all_apply=True,
                         compute_dtype=None, tm=256, tn=512, tk=512,
                         vmem_limit_bytes=32 * 1024 * 1024):
    """x:(M,K)  weight,mask:(N,K)  matrix_A:(K,r)  matrix_B:(r,N)  bias:(N,)|None.

    compute_dtype: dtype fed to the MXU (default: x.dtype).  Pass jnp.bfloat16
    for native-bf16 matmuls (accumulation is always f32).
    """
    M, K = x.shape
    N, K2 = weight.shape
    assert K2 == K, "weight must be (out_features, in_features)"
    r = matrix_A.shape[1]
    out_dtype = x.dtype
    cdt = jnp.dtype(compute_dtype) if compute_dtype is not None else x.dtype
    if bias is None:
        bias = jnp.zeros((N,), jnp.float32)

    # Balanced tile clamp: at most one 8/128 granule of padding; tn/tk prefer
    # 256-multiples (v6e/v7x MXU width) when that adds no padding.
    tm = _pick_tile(M, tm, 8)
    tn = _pick_tile(N, tn, 128, mxu=256)
    tk = _pick_tile(K, tk, 128, mxu=256)
    Mp, Np, Kp = _round_up(M, tm), _round_up(N, tn), _round_up(K, tk)
    r_pad = _round_up(max(r, 1), 128)   # lane-aligned low-rank contraction

    x_p = _pad2(x.astype(cdt), Mp, Kp)                             # (Mp, Kp)
    wt_p = _pad2(jnp.transpose(weight).astype(cdt), Kp, Np)        # (Kp, Np)
    bias_p = jnp.pad(bias.astype(jnp.float32), (0, Np - N)).reshape(1, Np)
    gamma_arr = jnp.asarray(gamma, jnp.float32).reshape(1)

    isz = jnp.dtype(cdt).itemsize
    matmul_cost = pl.CostEstimate(
        flops=2 * Mp * Np * Kp, transcendentals=0,
        bytes_accessed=isz * (Mp * Kp + Kp * Np) + 4 * Mp * Np)
    matmul_params = pltpu.CompilerParams(
        dimension_semantics=("parallel", "parallel", "arbitrary"),
        vmem_limit_bytes=vmem_limit_bytes)

    if gamma_all_apply and not w_zero:
        # ---- fast path: mask is provably unused; factor the low-rank term ---- #
        xa = jnp.dot(x.astype(jnp.float32), matrix_A.astype(jnp.float32),
                     precision=jax.lax.Precision.HIGHEST)          # (M, r) tiny
        xa_p = _pad2(xa.astype(cdt), Mp, r_pad)
        b_p = _pad2(matrix_B.astype(cdt), r_pad, Np)
        out_p = pl.pallas_call(
            _fused_lowrank_linear_kernel,
            out_shape=jax.ShapeDtypeStruct((Mp, Np), out_dtype),
            grid_spec=pltpu.PrefetchScalarGridSpec(
                num_scalar_prefetch=0,
                grid=(Mp // tm, Np // tn, Kp // tk),
                in_specs=[
                    pl.BlockSpec(memory_space=pltpu.MemorySpace.SMEM),  # gamma
                    pl.BlockSpec((tm, tk), lambda i, j, k: (i, k)),     # x
                    pl.BlockSpec((tk, tn), lambda i, j, k: (k, j)),     # W^T
                    pl.BlockSpec((tm, r_pad), lambda i, j, k: (i, 0)),  # x @ A
                    pl.BlockSpec((r_pad, tn), lambda i, j, k: (0, j)),  # B
                    pl.BlockSpec((1, tn), lambda i, j, k: (0, j)),      # bias
                ],
                out_specs=pl.BlockSpec((tm, tn), lambda i, j, k: (i, j)),
                scratch_shapes=[pltpu.VMEM((tm, tn), jnp.float32)],
            ),
            compiler_params=matmul_params,
            cost_estimate=matmul_cost,
        )(gamma_arr, x_p, wt_p, xa_p, b_p, bias_p)
        return out_p[:M, :N]

    # ---- masked paths: mask as int8, A/B streamed per tile (no A@B in HBM) ---- #
    maskt_p = _pad2(jnp.transpose(mask).astype(jnp.int8), Kp, Np)
    a_p = _pad2(matrix_A.astype(cdt), Kp, r_pad)
    b_p = _pad2(matrix_B.astype(cdt), r_pad, Np)

    if Mp // tm <= 2:
        # Small batch: weight streamed at most twice anyway -> fuse blend+select
        # into the matmul K-loop; no separate W_eff HBM write/read.
        out_p = pl.pallas_call(
            functools.partial(_fused_masked_linear_kernel, w_zero=w_zero,
                              gamma_all_apply=gamma_all_apply),
            out_shape=jax.ShapeDtypeStruct((Mp, Np), out_dtype),
            grid_spec=pltpu.PrefetchScalarGridSpec(
                num_scalar_prefetch=0,
                grid=(Mp // tm, Np // tn, Kp // tk),
                in_specs=[
                    pl.BlockSpec(memory_space=pltpu.MemorySpace.SMEM),   # gamma
                    pl.BlockSpec((tm, tk), lambda i, j, k: (i, k)),      # x
                    pl.BlockSpec((tk, tn), lambda i, j, k: (k, j)),      # W^T
                    pl.BlockSpec((tk, tn), lambda i, j, k: (k, j)),      # mask^T
                    pl.BlockSpec((tk, r_pad), lambda i, j, k: (k, 0)),   # A
                    pl.BlockSpec((r_pad, tn), lambda i, j, k: (0, j)),   # B
                    pl.BlockSpec((1, tn), lambda i, j, k: (0, j)),       # bias
                ],
                out_specs=pl.BlockSpec((tm, tn), lambda i, j, k: (i, j)),
                scratch_shapes=[pltpu.VMEM((tm, tn), jnp.float32)],
            ),
            compiler_params=matmul_params,
            cost_estimate=pl.CostEstimate(
                flops=2 * Mp * Np * Kp + 2 * (Mp // tm) * Kp * Np * r_pad,
                transcendentals=0,
                bytes_accessed=isz * (Mp * Kp + Kp * Np) + Kp * Np + 4 * Mp * Np),
        )(gamma_arr, x_p, wt_p, maskt_p, a_p, b_p, bias_p)
        return out_p[:M, :N]

    # Many M tiles: build W_eff^T ONCE (emitted in compute dtype), then a plain
    # tiled matmul consumes it.
    weff_t = pl.pallas_call(
        functools.partial(_build_weff_kernel, w_zero=w_zero,
                          gamma_all_apply=gamma_all_apply),
        out_shape=jax.ShapeDtypeStruct((Kp, Np), cdt),
        grid_spec=pltpu.PrefetchScalarGridSpec(
            num_scalar_prefetch=0,
            grid=(Kp // tk, Np // tn),
            in_specs=[
                pl.BlockSpec(memory_space=pltpu.MemorySpace.SMEM),       # gamma
                pl.BlockSpec((tk, tn), lambda kb, jb: (kb, jb)),         # W^T
                pl.BlockSpec((tk, tn), lambda kb, jb: (kb, jb)),         # mask^T
                pl.BlockSpec((tk, r_pad), lambda kb, jb: (kb, 0)),       # A
                pl.BlockSpec((r_pad, tn), lambda kb, jb: (0, jb)),       # B
            ],
            out_specs=pl.BlockSpec((tk, tn), lambda kb, jb: (kb, jb)),
        ),
        compiler_params=pltpu.CompilerParams(
            dimension_semantics=("parallel", "parallel"),
            vmem_limit_bytes=vmem_limit_bytes),
        cost_estimate=pl.CostEstimate(
            flops=2 * Kp * Np * r_pad + 4 * Kp * Np, transcendentals=0,
            bytes_accessed=(2 * isz + 1) * Kp * Np),
    )(gamma_arr, wt_p, maskt_p, a_p, b_p)

    out_p = pl.pallas_call(
        _matmul_bias_kernel,
        out_shape=jax.ShapeDtypeStruct((Mp, Np), out_dtype),
        grid_spec=pltpu.PrefetchScalarGridSpec(
            num_scalar_prefetch=0,
            grid=(Mp // tm, Np // tn, Kp // tk),
            in_specs=[
                pl.BlockSpec((tm, tk), lambda i, j, k: (i, k)),          # x
                pl.BlockSpec((tk, tn), lambda i, j, k: (k, j)),          # W_eff^T
                pl.BlockSpec((1, tn), lambda i, j, k: (0, j)),           # bias
            ],
            out_specs=pl.BlockSpec((tm, tn), lambda i, j, k: (i, j)),
            scratch_shapes=[pltpu.VMEM((tm, tn), jnp.float32)],
        ),
        compiler_params=matmul_params,
        cost_estimate=matmul_cost,
    )(x_p, weff_t, bias_p)
    return out_p[:M, :N]


# --------------------------------------------------------------------------- #
# Pure-JAX reference (forward values of the PyTorch module, sparse_only=False).
# --------------------------------------------------------------------------- #
def _reference(x, weight, mask, matrix_A, matrix_B, gamma, bias, *,
               w_zero, gamma_all_apply):
    lowrank_w = (matrix_A @ matrix_B).T
    combined = gamma * weight + (1.0 - gamma) * lowrank_w
    if gamma_all_apply:
        eff = jnp.where(mask, combined, 0.0) if w_zero else combined
    else:
        eff = jnp.where(mask, combined, lowrank_w)
    out = jnp.matmul(x, eff.T, precision=jax.lax.Precision.HIGHEST)
    return out + bias


if __name__ == "__main__":
    # Small but non-trivial shapes: exercises multi-step K reduction, multiple
    # M tiles, balanced tile clamping, and ragged-edge padding in M/N/K.
    batch, in_features, out_features, rank = 272, 768, 320, 8
    sparsity, gamma = 0.5, 0.5

    key = jax.random.PRNGKey(0)
    k_x, k_w, k_a, k_b, k_m = jax.random.split(key, 5)

    x = jax.random.normal(k_x, (batch, in_features), jnp.float32)
    weight = jax.random.normal(k_w, (out_features, in_features),
                               jnp.float32) * 0.05
    matrix_A = jax.random.normal(k_a, (in_features, rank), jnp.float32) * 0.1
    matrix_B = jax.random.normal(k_b, (rank, out_features), jnp.float32) * 0.1
    bias = jnp.zeros((out_features,), jnp.float32)   # module inits bias to zeros

    # 'random' sparse_method mask: keep `sparsity * numel` entries.
    numel = out_features * in_features
    n_keep = int(sparsity * numel)
    perm = jax.random.permutation(k_m, numel)
    mask = jnp.zeros((numel,), jnp.bool_).at[perm[:n_keep]].set(True)
    mask = mask.reshape(out_features, in_features)

    # (w_zero, gamma_all_apply, compute_dtype, extra_kwargs, tolerance)
    configs = [
        (False, True,  None,         {},          1e-3),  # fast path, f32 MXU
        (True,  True,  None,         {},          1e-3),  # fused masked (<=2 M tiles)
        (False, False, None,         {},          1e-3),  # fused masked, lowrank fill
        (True,  True,  None,         {"tm": 64},  1e-3),  # build-W_eff path (>2 M tiles)
        (False, True,  jnp.bfloat16, {},          5e-2),  # fast path, native bf16 MXU
        (False, False, jnp.bfloat16, {},          5e-2),  # fused masked, bf16 MXU
    ]
    for w_zero, gaa, cdt, extra, tol in configs:
        out = hybrid_sparse_linear(x, weight, mask, matrix_A, matrix_B, gamma,
                                   bias, w_zero=w_zero, gamma_all_apply=gaa,
                                   compute_dtype=cdt, **extra)
        out = jax.block_until_ready(out)
        ref = _reference(x, weight, mask, matrix_A, matrix_B, gamma, bias,
                         w_zero=w_zero, gamma_all_apply=gaa)
        assert out.shape == ref.shape
        err = float(jnp.max(jnp.abs(out.astype(jnp.float32) - ref)))
        assert err < tol, (
            f"mismatch (w_zero={w_zero}, gamma_all_apply={gaa}, "
            f"compute_dtype={cdt}): max abs err {err}")

    print("KERNEL_OK")
</pallas_src>

<mosaic_0001>
module attributes {stable_mosaic.version = 11 : i64} {
  func.func @_fused_lowrank_linear_kernel(%arg0: i32, %arg1: i32, %arg2: i32, %arg3: memref<1xf32, #tpu.memory_space<smem>>, %arg4: memref<136x256xf32, #tpu.memory_space<vmem>>, %arg5: memref<256x384xf32, #tpu.memory_space<vmem>>, %arg6: memref<136x128xf32, #tpu.memory_space<vmem>>, %arg7: memref<128x384xf32, #tpu.memory_space<vmem>>, %arg8: memref<1x384xf32, #tpu.memory_space<vmem>>, %arg9: memref<136x384xf32, #tpu.memory_space<vmem>>, %arg10: memref<136x384xf32, #tpu.memory_space<vmem>>) attributes {dimension_semantics = [#tpu.dimension_semantics<parallel>, #tpu.dimension_semantics<parallel>, #tpu.dimension_semantics<arbitrary>], iteration_bounds = array<i64: 2, 1, 3>, scalar_prefetch = 0 : i64, scratch_operands = 1 : i64, tpu.core_type = #tpu.core_type<tc>, window_params = [{transform_indices = @transform_0, window_bounds = array<i64: 1>}, {transform_indices = @transform_1, window_bounds = array<i64: 136, 256>}, {transform_indices = @transform_2, window_bounds = array<i64: 256, 384>}, {transform_indices = @transform_3, window_bounds = array<i64: 136, 128>}, {transform_indices = @transform_4, window_bounds = array<i64: 128, 384>}, {transform_indices = @transform_5, window_bounds = array<i64: 1, 384>}, {transform_indices = @transform_6, window_bounds = array<i64: 136, 384>}]} {
    %c0_i32 = arith.constant 0 : i32
    %0 = arith.cmpi eq, %arg2, %c0_i32 : i32
    %1 = arith.extui %0 : i1 to i32
    %c0_i32_0 = arith.constant 0 : i32
    %2 = arith.cmpi ne, %1, %c0_i32_0 : i32
    scf.if %2 {
      %cst_9 = arith.constant 0.000000e+00 : f32
      %12 = vector.broadcast %cst_9 : f32 to vector<136x384xf32>
      %c0_10 = arith.constant 0 : index
      %c0_11 = arith.constant 0 : index
      %13 = vector.load %arg10[%c0_10, %c0_11] : memref<136x384xf32, #tpu.memory_space<vmem>>, vector<136x384xf32>
      tpu.vector_store %arg10[%c0_10, %c0_11], %12 {strides = array<i32>} : memref<136x384xf32, #tpu.memory_space<vmem>>, vector<136x384xf32>,
    } else {
    }
    %c0 = arith.constant 0 : index
    %c0_1 = arith.constant 0 : index
    %3 = vector.load %arg10[%c0, %c0_1] : memref<136x384xf32, #tpu.memory_space<vmem>>, vector<136x384xf32>
    %c0_2 = arith.constant 0 : index
    %c0_3 = arith.constant 0 : index
    %4 = vector.load %arg4[%c0_2, %c0_3] : memref<136x256xf32, #tpu.memory_space<vmem>>, vector<136x256xf32>
    %c0_4 = arith.constant 0 : index
    %c0_5 = arith.constant 0 : index
    %5 = vector.load %arg5[%c0_4, %c0_5] : memref<256x384xf32, #tpu.memory_space<vmem>>, vector<256x384xf32>
    %cst = arith.constant dense<0.000000e+00> : vector<136x384xf32>
    %6 = tpu.matmul %4, %5, %cst {dimension_numbers = #tpu.dot_dimension_numbers<[1], [0], [0], [1], [0, 0, 1, 1], [], []>} : vector<136x256xf32>, vector<256x384xf32>, vector<136x384xf32> -> vector<136x384xf32>
    %7 = arith.addf %3, %6 : vector<136x384xf32>
    %c0_6 = arith.constant 0 : index
    %c0_7 = arith.constant 0 : index
    %8 = vector.load %arg10[%c0_6, %c0_7] : memref<136x384xf32, #tpu.memory_space<vmem>>, vector<136x384xf32>
    tpu.vector_store %arg10[%c0_6, %c0_7], %7 {strides = array<i32>} : memref<136x384xf32, #tpu.memory_space<vmem>>, vector<136x384xf32>,
    %c2_i32 = arith.constant 2 : i32
    %9 = arith.cmpi eq, %arg2, %c2_i32 : i32
    %10 = arith.extui %9 : i1 to i32
    %c0_i32_8 = arith.constant 0 : i32
    %11 = arith.cmpi ne, %10, %c0_i32_8 : i32
    scf.if %11 {
      %c0_9 = arith.constant 0 : index
      %12 = memref.load %arg3[%c0_9] : memref<1xf32, #tpu.memory_space<smem>>
      %c0_10 = arith.constant 0 : index
      %c0_11 = arith.constant 0 : index
      %13 = vector.load %arg6[%c0_10, %c0_11] : memref<136x128xf32, #tpu.memory_space<vmem>>, vector<136x128xf32>
      %c0_12 = arith.constant 0 : index
      %c0_13 = arith.constant 0 : index
      %14 = vector.load %arg7[%c0_12, %c0_13] : memref<128x384xf32, #tpu.memory_space<vmem>>, vector<128x384xf32>
      %cst_14 = arith.constant dense<0.000000e+00> : vector<136x384xf32>
      %15 = tpu.matmul %13, %14, %cst_14 {dimension_numbers = #tpu.dot_dimension_numbers<[1], [0], [0], [1], [0, 0, 1, 1], [], []>} : vector<136x128xf32>, vector<128x384xf32>, vector<136x384xf32> -> vector<136x384xf32>
      %c0_15 = arith.constant 0 : index
      %c0_16 = arith.constant 0 : index
      %16 = vector.load %arg10[%c0_15, %c0_16] : memref<136x384xf32, #tpu.memory_space<vmem>>, vector<136x384xf32>
      %17 = vector.broadcast %12 : f32 to vector<136x384xf32>
      %18 = arith.mulf %17, %16 : vector<136x384xf32>
      %cst_17 = arith.constant 1.000000e+00 : f32
      %19 = arith.subf %cst_17, %12 : f32
      %20 = vector.broadcast %19 : f32 to vector<136x384xf32>
      %21 = arith.mulf %20, %15 : vector<136x384xf32>
      %22 = arith.addf %18, %21 : vector<136x384xf32>
      %c0_18 = arith.constant 0 : index
      %c0_19 = arith.constant 0 : index
      %23 = vector.load %arg8[%c0_18, %c0_19] : memref<1x384xf32, #tpu.memory_space<vmem>>, vector<1x384xf32>
      %24 = vector.broadcast %23 : vector<1x384xf32> to vector<136x384xf32>
      %25 = arith.addf %22, %24 : vector<136x384xf32>
      %c0_20 = arith.constant 0 : index
      %c0_21 = arith.constant 0 : index
      %26 = vector.load %arg9[%c0_20, %c0_21] : memref<136x384xf32, #tpu.memory_space<vmem>>, vector<136x384xf32>
      tpu.vector_store %arg9[%c0_20, %c0_21], %25 {strides = array<i32>} : memref<136x384xf32, #tpu.memory_space<vmem>>, vector<136x384xf32>,
    } else {
    }
    return
  }
  func.func @transform_0(%arg0: i32, %arg1: i32, %arg2: i32) -> i32 {
    %c0_i32 = arith.constant 0 : i32
    %c0_i32_0 = arith.constant 0 : i32
    return %c0_i32 : i32
  }
  func.func @transform_1(%arg0: i32, %arg1: i32, %arg2: i32) -> (i32, i32) {
    %c0_i32 = arith.constant 0 : i32
    return %arg0, %arg2 : i32, i32
  }
  func.func @transform_2(%arg0: i32, %arg1: i32, %arg2: i32) -> (i32, i32) {
    %c0_i32 = arith.constant 0 : i32
    return %arg2, %arg1 : i32, i32
  }
  func.func @transform_3(%arg0: i32, %arg1: i32, %arg2: i32) -> (i32, i32) {
    %c0_i32 = arith.constant 0 : i32
    %c0_i32_0 = arith.constant 0 : i32
    return %arg0, %c0_i32 : i32, i32
  }
  func.func @transform_4(%arg0: i32, %arg1: i32, %arg2: i32) -> (i32, i32) {
    %c0_i32 = arith.constant 0 : i32
    %c0_i32_0 = arith.constant 0 : i32
    return %c0_i32, %arg1 : i32, i32
  }
  func.func @transform_5(%arg0: i32, %arg1: i32, %arg2: i32) -> (i32, i32) {
    %c0_i32 = arith.constant 0 : i32
    %c0_i32_0 = arith.constant 0 : i32
    return %c0_i32, %arg1 : i32, i32
  }
  func.func @transform_6(%arg0: i32, %arg1: i32, %arg2: i32) -> (i32, i32) {
    %c0_i32 = arith.constant 0 : i32
    return %arg0, %arg1 : i32, i32
  }
}

</mosaic_0001>

<llo_original>
// kernel: tpu_custom_call.1
$region0: #{tpu_custom_call.1}
  #allocation0 [shape = 'u32[]', space=smem, size = 0x4, offset = 0x4, fixed_abs, tag = 'smem constant byte address 0x4 - core index']
  #allocation1 [shape = 'u32[144,128]{1,0:T(1,128)}', space=vmem, size = 0x12000, scoped, tag = 'internal scratch']
  #allocation2 [shape = 'f32[136,384]{1,0:T(8,128)}', space=vmem, size = 0x33000, scoped, tag = 'scratch operand']
  #allocation3 [shape = 'f32[1]{0:T(128)S(6)}', space=smem, size = 0x200, scoped, tag = 'scoped memory for tpu_custom_call.1']
  %s0 = inlined_call_operand.<no memory space> [shape: f32[1], index: 0, kind: input, shape index: {}]
  %s1 = inlined_call_operand.hbm [shape: f32[272,768], index: 1, kind: input, shape index: {}]
  %s2 = inlined_call_operand.hbm [shape: f32[768,384], index: 2, kind: input, shape index: {}]
  %s3 = inlined_call_operand.hbm [shape: f32[272,128], index: 3, kind: input, shape index: {}]
  %s4 = inlined_call_operand.hbm [shape: f32[128,384], index: 4, kind: input, shape index: {}]
  %s5 = inlined_call_operand.hbm [shape: f32[1,384], index: 5, kind: input, shape index: {}]
  %s6 = inlined_call_operand.hbm [shape: f32[272,384], index: 6, kind: output, shape index: {}]
  %s7 = sld [smem:[#allocation0]]
  $region85: #{tpu_custom_call.1} parent=0
    _
  %s9 = ssub.s32 1, %s7
  %s10 = scalar_select 0, %s9, %s7
  %11 = sst [smem:[#allocation3]] %s0
  $region1: #{tpu_custom_call.1} parent=0
    #allocation4 [shape = 'u8[278528]{0}', space=vmem, size = 0x44000, scoped, tag = 'input window, operand 1']
    #allocation5 [shape = 's32[2]{0}', space=sflag, size = 0x8, scoped, tag = 'scoped memory for tpu_custom_call.1']
    #allocation6 [shape = 's32[2]{0}', space=sflag, size = 0x8, scoped, tag = 'scoped memory for tpu_custom_call.1']
    #allocation7 [shape = 'u8[786432]{0}', space=vmem, size = 0xc0000, scoped, tag = 'input window, operand 2']
    #allocation8 [shape = 's32[2]{0}', space=sflag, size = 0x8, scoped, tag = 'scoped memory for tpu_custom_call.1']
    #allocation9 [shape = 'u8[139264]{0}', space=vmem, size = 0x22000, scoped, tag = 'input window, operand 3']
    #allocation10 [shape = 'u8[196608]{0}', space=vmem, size = 0x30000, scoped, tag = 'input window, operand 4, single buffered']
    #allocation11 [shape = 's32[1]{0}', space=sflag, size = 0x4, scoped, tag = 'scoped memory for tpu_custom_call.1']
    #allocation12 [shape = 'u8[1536]{0}', space=vmem, size = 0x800, scoped, tag = 'input window, operand 5, single buffered']
    #allocation13 [shape = 'u8[417792]{0}', space=vmem, size = 0x66000, scoped, tag = 'output window, operand 0']
    %12 = vsyncpa [#allocation5], 0
    %s13 = scalar_lea.sflag [#allocation5], 1
    %14 = vsyncpa %s13, 0
    %15 = vsyncpa [#allocation8], 0
    %s16 = scalar_lea.sflag [#allocation8], 1
    %17 = vsyncpa %s16, 0
    %18 = vsyncpa [#allocation11], 0
    %19 = vsyncpa [#allocation6], 0
    %s20 = scalar_lea.sflag [#allocation6], 1
    %21 = vsyncpa %s20, 0
    loop: start=0, step=1, limit=8
    $region2: #{tpu_custom_call.1} parent=1 // loop_pre_header
      _
    $region3: #{tpu_custom_call.1} parent=1 // loop_header
      %s23 = sphi 0, %s27
      %p24 = scmp.ge.s32.totalorder %s23, 8
      %s30 = sphi 0, %s49
      %s31 = sphi 0, %s45
      %s32 = sphi 0, %s41
      %s33 = sphi 0, %s30
      %s34 = sphi 0, %s31
      %s35 = sphi 0, %s32
      %s36 = sphi 0, %s33
      %s37 = sphi 0, %s34
      %s38 = sphi 0, %s35
      %s50 = sphi 0, %s50
      %s52 = sphi 0, %s50
      %s53 = sphi 0, %s52
      %s67 = sphi 0, %s53
      %s75 = sphi 0, %s77
      %s78 = sphi 0, %s75
      %s79 = sphi 0, %s78
      %s95 = sphi 0, %s79
      %s103 = sphi 0, %s105
      %s106 = sphi 0, %s103
      %s107 = sphi 0, %s106
      %s123 = sphi 0, %s107
      %s129 = sphi 0, %s131
      %s132 = sphi 0, %s129
      %s133 = sphi 0, %s132
      %s149 = sphi 0, %s133
      %s155 = sphi 0, %s157
      %s158 = sphi 0, %s155
      %s159 = sphi 0, %s158
      %s175 = sphi 0, %s159
      %s181 = sphi 0, %s183
      %s184 = sphi 0, %s181
      %s185 = sphi 0, %s184
      %s201 = sphi 0, %s185
      %s209 = sphi 0, %s211
      %s212 = sphi 0, %s209
      %s213 = sphi 0, %s212
      %s229 = sphi 0, %s213
    $region4: #{tpu_custom_call.1} parent=1 // loop_header_branch
      %26 = sbr.rel (%p24) target = $region8
    $region5: #{tpu_custom_call.1} parent=1 // loop_body
      %s28 = ssub.s32 %s23, 1
      %s29 = ssub.s32 %s23, 2
      %s39 = sadd.s32 1, %s32
      %p40 = scmp.ge.s32.totalorder %s39, 3
      %s41 = scalar_select %p40, 0, %s39
      %s42 = sadd.s32 1, %s31
      %s43 = scalar_select %p40, %s42, %s31
      %p44 = scmp.ge.s32.totalorder %s43, 1
      %s45 = scalar_select %p44, 0, %s43
      %s46 = sadd.s32 1, %s30
      %s47 = scalar_select %p44, %s46, %s30
      %p48 = scmp.ge.s32.totalorder %s47, 2
      %s49 = scalar_select %p48, 0, %s47
      %s51 = sadd.s32 %s50, 1
      %p54 = scmp.eq.s32.totalorder %s23, 5
      %p55 = scmp.ne.s32.totalorder %s50, %s52
      %p56 = scmp.eq.s32.totalorder %s23, 0
      %p57 = por %p55, %p56
      %p58 = scmp.ne.s32.totalorder %s50, %s52
      %p59 = scmp.eq.s32.totalorder %s28, 5
      %p60 = por %p58, %p59
      %p61 = scmp.ne.s32.totalorder %s52, %s53
      %p62 = scmp.eq.s32.totalorder %s28, 0
      %p63 = por %p61, %p62
      %p64 = scmp.ne.s32.totalorder %s52, %s53
      %p65 = scmp.eq.s32.totalorder %s29, 5
      %p66 = por %p64, %p65
      %p68 = scmp.ne.s32.totalorder %s53, %s67
      %p69 = scmp.eq.s32.totalorder %s29, 0
      %p70 = por %p68, %p69
      %s71 = ssub.s32 %s30, %s49
      %s72 = ssub.s32 %s32, %s41
      %s73 = sor.u32 %s71, %s72
      %p74 = scmp.eq.s32.totalorder %s73, 0
      %s76 = sadd.s32 %s75, 1
      %s77 = scalar_select %p74, %s75, %s76
      %p80 = pneg %p74
      %p81 = scmp.eq.s32.totalorder %s23, 5
      %p82 = por %p80, %p81
      %p83 = scmp.ne.s32.totalorder %s75, %s78
      %p84 = scmp.eq.s32.totalorder %s23, 0
      %p85 = por %p83, %p84
      %p86 = scmp.ne.s32.totalorder %s75, %s78
      %p87 = scmp.eq.s32.totalorder %s28, 5
      %p88 = por %p86, %p87
      %p89 = scmp.ne.s32.totalorder %s78, %s79
      %p90 = scmp.eq.s32.totalorder %s28, 0
      %p91 = por %p89, %p90
      %p92 = scmp.ne.s32.totalorder %s78, %s79
      %p93 = scmp.eq.s32.totalorder %s29, 5
      %p94 = por %p92, %p93
      %p96 = scmp.ne.s32.totalorder %s79, %s95
      %p97 = scmp.eq.s32.totalorder %s29, 0
      %p98 = por %p96, %p97
      %s99 = ssub.s32 %s32, %s41
      %s100 = ssub.s32 %s31, %s45
      %s101 = sor.u32 %s99, %s100
      %p102 = scmp.eq.s32.totalorder %s101, 0
      %s104 = sadd.s32 %s103, 1
      %s105 = scalar_select %p102, %s103, %s104
      %p108 = pneg %p102
      %p109 = scmp.eq.s32.totalorder %s23, 5
      %p110 = por %p108, %p109
      %p111 = scmp.ne.s32.totalorder %s103, %s106
      %p112 = scmp.eq.s32.totalorder %s23, 0
      %p113 = por %p111, %p112
      %p114 = scmp.ne.s32.totalorder %s103, %s106
      %p115 = scmp.eq.s32.totalorder %s28, 5
      %p116 = por %p114, %p115
      %p117 = scmp.ne.s32.totalorder %s106, %s107
      %p118 = scmp.eq.s32.totalorder %s28, 0
      %p119 = por %p117, %p118
      %p120 = scmp.ne.s32.totalorder %s106, %s107
      %p121 = scmp.eq.s32.totalorder %s29, 5
      %p122 = por %p120, %p121
      %p124 = scmp.ne.s32.totalorder %s107, %s123
      %p125 = scmp.eq.s32.totalorder %s29, 0
      %p126 = por %p124, %p125
      %s127 = ssub.s32 %s30, %s49
      %p128 = scmp.eq.s32.totalorder %s127, 0
      %s130 = sadd.s32 %s129, 1
      %s131 = scalar_select %p128, %s129, %s130
      %p134 = pneg %p128
      %p135 = scmp.eq.s32.totalorder %s23, 5
      %p136 = por %p134, %p135
      %p137 = scmp.ne.s32.totalorder %s129, %s132
      %p138 = scmp.eq.s32.totalorder %s23, 0
      %p139 = por %p137, %p138
      %p140 = scmp.ne.s32.totalorder %s129, %s132
      %p141 = scmp.eq.s32.totalorder %s28, 5
      %p142 = por %p140, %p141
      %p143 = scmp.ne.s32.totalorder %s132, %s133
      %p144 = scmp.eq.s32.totalorder %s28, 0
      %p145 = por %p143, %p144
      %p146 = scmp.ne.s32.totalorder %s132, %s133
      %p147 = scmp.eq.s32.totalorder %s29, 5
      %p148 = por %p146, %p147
      %p150 = scmp.ne.s32.totalorder %s133, %s149
      %p151 = scmp.eq.s32.totalorder %s29, 0
      %p152 = por %p150, %p151
      %s153 = ssub.s32 %s31, %s45
      %p154 = scmp.eq.s32.totalorder %s153, 0
      %s156 = sadd.s32 %s155, 1
      %s157 = scalar_select %p154, %s155, %s156
      %p160 = pneg %p154
      %p161 = scmp.eq.s32.totalorder %s23, 5
      %p162 = por %p160, %p161
      %p163 = scmp.ne.s32.totalorder %s155, %s158
      %p164 = scmp.eq.s32.totalorder %s23, 0
      %p165 = por %p163, %p164
      %p166 = scmp.ne.s32.totalorder %s155, %s158
      %p167 = scmp.eq.s32.totalorder %s28, 5
      %p168 = por %p166, %p167
      %p169 = scmp.ne.s32.totalorder %s158, %s159
      %p170 = scmp.eq.s32.totalorder %s28, 0
      %p171 = por %p169, %p170
      %p172 = scmp.ne.s32.totalorder %s158, %s159
      %p173 = scmp.eq.s32.totalorder %s29, 5
      %p174 = por %p172, %p173
      %p176 = scmp.ne.s32.totalorder %s159, %s175
      %p177 = scmp.eq.s32.totalorder %s29, 0
      %p178 = por %p176, %p177
      %s179 = ssub.s32 %s31, %s45
      %p180 = scmp.eq.s32.totalorder %s179, 0
      %s182 = sadd.s32 %s181, 1
      %s183 = scalar_select %p180, %s181, %s182
      %p186 = pneg %p180
      %p187 = scmp.eq.s32.totalorder %s23, 5
      %p188 = por %p186, %p187
      %p189 = scmp.ne.s32.totalorder %s181, %s184
      %p190 = scmp.eq.s32.totalorder %s23, 0
      %p191 = por %p189, %p190
      %p192 = scmp.ne.s32.totalorder %s181, %s184
      %p193 = scmp.eq.s32.totalorder %s28, 5
      %p194 = por %p192, %p193
      %p195 = scmp.ne.s32.totalorder %s184, %s185
      %p196 = scmp.eq.s32.totalorder %s28, 0
      %p197 = por %p195, %p196
      %p198 = scmp.ne.s32.totalorder %s184, %s185
      %p199 = scmp.eq.s32.totalorder %s29, 5
      %p200 = por %p198, %p199
      %p202 = scmp.ne.s32.totalorder %s185, %s201
      %p203 = scmp.eq.s32.totalorder %s29, 0
      %p204 = por %p202, %p203
      %s205 = ssub.s32 %s30, %s49
      %s206 = ssub.s32 %s31, %s45
      %s207 = sor.u32 %s205, %s206
      %p208 = scmp.eq.s32.totalorder %s207, 0
      %s210 = sadd.s32 %s209, 1
      %s211 = scalar_select %p208, %s209, %s210
      %p214 = pneg %p208
      %p215 = scmp.eq.s32.totalorder %s23, 5
      %p216 = por %p214, %p215
      %p217 = scmp.ne.s32.totalorder %s209, %s212
      %p218 = scmp.eq.s32.totalorder %s23, 0
      %p219 = por %p217, %p218
      %p220 = scmp.ne.s32.totalorder %s209, %s212
      %p221 = scmp.eq.s32.totalorder %s28, 5
      %p222 = por %p220, %p221
      %p223 = scmp.ne.s32.totalorder %s212, %s213
      %p224 = scmp.eq.s32.totalorder %s28, 0
      %p225 = por %p223, %p224
      %p226 = scmp.ne.s32.totalorder %s212, %s213
      %p227 = scmp.eq.s32.totalorder %s29, 5
      %p228 = por %p226, %p227
      %p230 = scmp.ne.s32.totalorder %s213, %s229
      %p231 = scmp.eq.s32.totalorder %s29, 0
      %p232 = por %p230, %p231
      %p233 = scmp.le.s32.totalorder 1, %s23
      %p234 = scmp.lt.s32.totalorder %s23, 7
      %p235 = pnand %p233, %p234
      %p236 = pneg %p235
      // Predicated region
      $region9: #{tpu_custom_call.1} parent=5 // pred_check
        _
      $region10: #{tpu_custom_call.1} parent=5 // pred_check_branch
        %238 = sbr.rel (%p235) target = $region12
      $region11: #{tpu_custom_call.1} parent=5 // pred_region
        %s239 = ssub.s32 %s23, 1
        // Predicated region
        $region13: #{tpu_custom_call.1} parent=11 // pred_check
          %p240 = pneg %p63
        $region14: #{tpu_custom_call.1} parent=11 // pred_check_branch
          %242 = sbr.rel (%p240) target = $region16
        $region15: #{tpu_custom_call.1} parent=11 // pred_region
          _
        $region16: #{tpu_custom_call.1} parent=11 // pred_fallthru
          _
        // Predicated region
        $region17: #{tpu_custom_call.1} parent=11 // pred_check
          %p243 = pneg %p171
        $region18: #{tpu_custom_call.1} parent=11 // pred_check_branch
          %245 = sbr.rel (%p243) target = $region20
        $region19: #{tpu_custom_call.1} parent=11 // pred_region
          %s246 = smul.u32 3, %s34
          %s248 = ssub.s32 6144, 6144
          %249 = vsyncadd [#allocation11], %s248
          %s250 = smul.addr %s246, 128
          %s251 = scalar_lea.hbm %s4, %s250
          %s252 = sshll.u32 [#allocation10], 4
          %s253 = int_to_ptr.vmem [resolvable:$true] %s252
          %258 = dma.hbm_to_vmem [thread:$0]  %s251, 6144, %s253, [#allocation11], 384, 384, 24
        $region20: #{tpu_custom_call.1} parent=11 // pred_fallthru
          _
        // Predicated region
        $region21: #{tpu_custom_call.1} parent=11 // pred_check
          %p259 = pneg %p197
        $region22: #{tpu_custom_call.1} parent=11 // pred_check_branch
          %261 = sbr.rel (%p259) target = $region24
        $region23: #{tpu_custom_call.1} parent=11 // pred_region
          %s262 = smul.u32 3, %s34
          %s264 = ssub.s32 48, 48
          %265 = vsyncadd [#allocation11], %s264
          %s266 = smul.addr %s262, 16
          %s267 = scalar_lea.hbm %s5, %s266
          %s269 = sshll.u32 [#allocation12], 4
          %s270 = int_to_ptr.vmem [resolvable:$true] %s269
          %272 = dma.hbm_to_vmem [thread:$0]  %s267, 48, %s270, [#allocation11]
        $region24: #{tpu_custom_call.1} parent=11 // pred_fallthru
          _
      $region12: #{tpu_custom_call.1} parent=5 // pred_fallthru
        _
      %p273 = scmp.lt.s32.totalorder %s23, 6
      // Predicated region
      $region25: #{tpu_custom_call.1} parent=5 // pred_check
        %p274 = pneg %p273
      $region26: #{tpu_custom_call.1} parent=5 // pred_check_branch
        %276 = sbr.rel (%p274) target = $region28
      $region27: #{tpu_custom_call.1} parent=5 // pred_region
        // Predicated region
        $region29: #{tpu_custom_call.1} parent=27 // pred_check
          %p277 = pneg %p85
        $region30: #{tpu_custom_call.1} parent=27 // pred_check_branch
          %279 = sbr.rel (%p277) target = $region32
        $region31: #{tpu_custom_call.1} parent=27 // pred_region
          %s280 = sand.u32 %s75, 1
          %s281 = scalar_lea.sflag [#allocation5], %s280
          %s282 = sand.u32 %s75, 1
          %s283 = smul.addr %s282, 272
          %s284 = scalar_lea.vmem [#allocation4], %s283
          %s285 = smul.u32 17, %s30
          %s286 = smul.u32 2, %s32
          %s288 = ssub.s32 4352, 4352
          %289 = vsyncadd %s281, %s288
          %s290 = smul.addr %s285, 6
          %s291 = sadd.s32 %s286, %s290
          %s292 = smul.addr %s291, 128
          %s293 = scalar_lea.hbm %s1, %s292
          %s294 = sshll.u32 %s284, 4
          %s295 = int_to_ptr.vmem [resolvable:$true] %s294
          %300 = dma.hbm_to_vmem [thread:$0]  %s293, 4352, %s295, %s281, 768, 256, 16
        $region32: #{tpu_custom_call.1} parent=27 // pred_fallthru
          _
        // Predicated region
        $region33: #{tpu_custom_call.1} parent=27 // pred_check
          %p301 = pneg %p113
        $region34: #{tpu_custom_call.1} parent=27 // pred_check_branch
          %303 = sbr.rel (%p301) target = $region36
        $region35: #{tpu_custom_call.1} parent=27 // pred_region
          %s304 = sand.u32 %s23, 1
          %s305 = scalar_lea.sflag [#allocation8], %s304
          %s306 = sand.u32 %s103, 1
          %s307 = smul.addr %s306, 768
          %s308 = scalar_lea.vmem [#allocation7], %s307
          %s309 = smul.u32 32, %s32
          %s310 = smul.u32 3, %s31
          %s312 = ssub.s32 12288, 12288
          %313 = vsyncadd %s305, %s312
          %s314 = smul.addr %s309, 3
          %s315 = sadd.s32 %s310, %s314
          %s316 = smul.addr %s315, 128
          %s317 = scalar_lea.hbm %s2, %s316
          %s318 = sshll.u32 %s308, 4
          %s319 = int_to_ptr.vmem [resolvable:$true] %s318
          %324 = dma.hbm_to_vmem [thread:$0]  %s317, 12288, %s319, %s305, 384, 384, 24
        $region36: #{tpu_custom_call.1} parent=27 // pred_fallthru
          _
        // Predicated region
        $region37: #{tpu_custom_call.1} parent=27 // pred_check
          %p325 = pneg %p139
        $region38: #{tpu_custom_call.1} parent=27 // pred_check_branch
          %327 = sbr.rel (%p325) target = $region40
        $region39: #{tpu_custom_call.1} parent=27 // pred_region
          %s328 = sand.u32 %s23, 1
          %s329 = scalar_lea.sflag [#allocation8], %s328
          %s330 = sand.u32 %s129, 1
          %s331 = smul.addr %s330, 136
          %s332 = scalar_lea.vmem [#allocation9], %s331
          %s333 = smul.u32 17, %s30
          %s335 = ssub.s32 2176, 2176
          %336 = vsyncadd %s329, %s335
          %s337 = smul.addr %s333, 128
          %s338 = scalar_lea.hbm %s3, %s337
          %s339 = sshll.u32 %s332, 4
          %s340 = int_to_ptr.vmem [resolvable:$true] %s339
          %345 = dma.hbm_to_vmem [thread:$0]  %s338, 2176, %s340, %s329, 128, 128, 8
        $region40: #{tpu_custom_call.1} parent=27 // pred_fallthru
          _
      $region28: #{tpu_custom_call.1} parent=5 // pred_fallthru
        _
      %p346 = scmp.le.s32.totalorder 1, %s23
      %p347 = scmp.lt.s32.totalorder %s23, 7
      %p348 = pnand %p346, %p347
      %p349 = pneg %p348
      // Predicated region
      $region41: #{tpu_custom_call.1} parent=5 // pred_check
        _
      $region42: #{tpu_custom_call.1} parent=5 // pred_check_branch
        %351 = sbr.rel (%p348) target = $region44
      $region43: #{tpu_custom_call.1} parent=5 // pred_region
        %s352 = ssub.s32 %s23, 1
        %s353 = sand.u32 %s78, 1
        %s354 = scalar_lea.sflag [#allocation5], %s353
        %s355 = sand.u32 %s78, 1
        %s356 = smul.addr %s355, 272
        %s357 = scalar_lea.vmem [#allocation4], %s356
        // Predicated region
        $region45: #{tpu_custom_call.1} parent=43 // pred_check
          %p358 = pneg %p91
        $region46: #{tpu_custom_call.1} parent=43 // pred_check_branch
          %360 = sbr.rel (%p358) target = $region48
        $region47: #{tpu_custom_call.1} parent=43 // pred_region
          %361 = dma.done %s354, 4352
        $region48: #{tpu_custom_call.1} parent=43 // pred_fallthru
          _
        %s362 = sand.u32 %s28, 1
        %s363 = scalar_lea.sflag [#allocation8], %s362
        %s364 = sand.u32 %s106, 1
        %s365 = smul.addr %s364, 768
        %s366 = scalar_lea.vmem [#allocation7], %s365
        // Predicated region
        $region49: #{tpu_custom_call.1} parent=43 // pred_check
          %p367 = pneg %p119
        $region50: #{tpu_custom_call.1} parent=43 // pred_check_branch
          %369 = sbr.rel (%p367) target = $region52
        $region51: #{tpu_custom_call.1} parent=43 // pred_region
          %370 = dma.done %s363, 12288
        $region52: #{tpu_custom_call.1} parent=43 // pred_fallthru
          _
        %s371 = sand.u32 %s28, 1
        %s372 = scalar_lea.sflag [#allocation8], %s371
        %s373 = sand.u32 %s132, 1
        %s374 = smul.addr %s373, 136
        %s375 = scalar_lea.vmem [#allocation9], %s374
        // Predicated region
        $region53: #{tpu_custom_call.1} parent=43 // pred_check
          %p376 = pneg %p145
        $region54: #{tpu_custom_call.1} parent=43 // pred_check_branch
          %378 = sbr.rel (%p376) target = $region56
        $region55: #{tpu_custom_call.1} parent=43 // pred_region
          %379 = dma.done %s372, 2176
        $region56: #{tpu_custom_call.1} parent=43 // pred_fallthru
          _
        // Predicated region
        $region57: #{tpu_custom_call.1} parent=43 // pred_check
          %p380 = pneg %p171
        $region58: #{tpu_custom_call.1} parent=43 // pred_check_branch
          %382 = sbr.rel (%p380) target = $region60
        $region59: #{tpu_custom_call.1} parent=43 // pred_region
          %383 = dma.done [#allocation11], 6144
        $region60: #{tpu_custom_call.1} parent=43 // pred_fallthru
          _
        // Predicated region
        $region61: #{tpu_custom_call.1} parent=43 // pred_check
          %p384 = pneg %p197
        $region62: #{tpu_custom_call.1} parent=43 // pred_check_branch
          %386 = sbr.rel (%p384) target = $region64
        $region63: #{tpu_custom_call.1} parent=43 // pred_region
          %387 = dma.done [#allocation11], 48
        $region64: #{tpu_custom_call.1} parent=43 // pred_fallthru
          _
        %p388 = pneg %p63
        %p389 = pneg %p60
        %s390 = sand.u32 %s78, 1
        %s391 = scalar_lea.sflag [#allocation5], %s390
        %s392 = sand.u32 %s78, 1
        %s393 = smul.addr %s392, 272
        %s394 = scalar_lea.vmem [#allocation4], %s393
        %p395 = pneg %p91
        %p396 = pneg %p88
        %s397 = sand.u32 %s28, 1
        %s398 = scalar_lea.sflag [#allocation8], %s397
        %s399 = sand.u32 %s106, 1
        %s400 = smul.addr %s399, 768
        %s401 = scalar_lea.vmem [#allocation7], %s400
        %p402 = pneg %p119
        %p403 = pneg %p116
        %s404 = sand.u32 %s28, 1
        %s405 = scalar_lea.sflag [#allocation8], %s404
        %s406 = sand.u32 %s132, 1
        %s407 = smul.addr %s406, 136
        %s408 = scalar_lea.vmem [#allocation9], %s407
        %p409 = pneg %p145
        %p410 = pneg %p142
        %p411 = pneg %p171
        %p412 = pneg %p168
        %p413 = pneg %p197
        %p414 = pneg %p194
        %p415 = pneg %p225
        %p416 = pneg %p222
        %s417 = sand.u32 %s212, 1
        %s418 = scalar_lea.sflag [#allocation6], %s417
        %s419 = sand.u32 %s212, 1
        %s420 = smul.addr %s419, 408
        %s421 = scalar_lea.vmem [#allocation13], %s420
        %s422 = smul.u32 17, %s33
        %s423 = smul.u32 2, %s35
        %s424 = smul.u32 32, %s35
        %s425 = smul.u32 3, %s34
        %s426 = smul.u32 17, %s33
        %s427 = smul.u32 3, %s34
        %s428 = smul.u32 3, %s34
        %s429 = smul.u32 17, %s33
        %s430 = smul.u32 3, %s34
        %p431 = scmp.eq.s32.totalorder %s35, 0
        // Predicated region
        $region65: #{tpu_custom_call.1} parent=43 // pred_check
          %p432 = pneg %p431
        $region66: #{tpu_custom_call.1} parent=43 // pred_check_branch
          %434 = sbr.rel (%p432) target = $region68
        $region67: #{tpu_custom_call.1} parent=43 // pred_region
          %435 = vst [vmem:[#allocation2] sm:$0xff] 0.0
          %436 = vst [vmem:[#allocation2 + $0x8] sm:$0xff] 0.0
          %437 = vst [vmem:[#allocation2 + $0x10] sm:$0xff] 0.0
          %438 = vst [vmem:[#allocation2 + $0x18] sm:$0xff] 0.0
          %439 = vst [vmem:[#allocation2 + $0x20] sm:$0xff] 0.0
          %440 = vst [vmem:[#allocation2 + $0x28] sm:$0xff] 0.0
          %441 = vst [vmem:[#allocation2 + $0x30] sm:$0xff] 0.0
          %442 = vst [vmem:[#allocation2 + $0x38] sm:$0xff] 0.0
          %443 = vst [vmem:[#allocation2 + $0x40] sm:$0xff] 0.0
          %444 = vst [vmem:[#allocation2 + $0x48] sm:$0xff] 0.0
          %445 = vst [vmem:[#allocation2 + $0x50] sm:$0xff] 0.0
          %446 = vst [vmem:[#allocation2 + $0x58] sm:$0xff] 0.0
          %447 = vst [vmem:[#allocation2 + $0x60] sm:$0xff] 0.0
          %448 = vst [vmem:[#allocation2 + $0x68] sm:$0xff] 0.0
          %449 = vst [vmem:[#allocation2 + $0x70] sm:$0xff] 0.0
          %450 = vst [vmem:[#allocation2 + $0x78] sm:$0xff] 0.0
          %451 = vst [vmem:[#allocation2 + $0x80] sm:$0xff] 0.0
          %452 = vst [vmem:[#allocation2 + $0x88] sm:$0xff] 0.0
          %453 = vst [vmem:[#allocation2 + $0x90] sm:$0xff] 0.0
          %454 = vst [vmem:[#allocation2 + $0x98] sm:$0xff] 0.0
          %455 = vst [vmem:[#allocation2 + $0xa0] sm:$0xff] 0.0
          %456 = vst [vmem:[#allocation2 + $0xa8] sm:$0xff] 0.0
          %457 = vst [vmem:[#allocation2 + $0xb0] sm:$0xff] 0.0
          %458 = vst [vmem:[#allocation2 + $0xb8] sm:$0xff] 0.0
          %459 = vst [vmem:[#allocation2 + $0xc0] sm:$0xff] 0.0
          %460 = vst [vmem:[#allocation2 + $0xc8] sm:$0xff] 0.0
          %461 = vst [vmem:[#allocation2 + $0xd0] sm:$0xff] 0.0
          %462 = vst [vmem:[#allocation2 + $0xd8] sm:$0xff] 0.0
          %463 = vst [vmem:[#allocation2 + $0xe0] sm:$0xff] 0.0
          %464 = vst [vmem:[#allocation2 + $0xe8] sm:$0xff] 0.0
          %465 = vst [vmem:[#allocation2 + $0xf0] sm:$0xff] 0.0
          %466 = vst [vmem:[#allocation2 + $0xf8] sm:$0xff] 0.0
          %467 = vst [vmem:[#allocation2 + $0x100] sm:$0xff] 0.0
          %468 = vst [vmem:[#allocation2 + $0x108] sm:$0xff] 0.0
          %469 = vst [vmem:[#allocation2 + $0x110] sm:$0xff] 0.0
          %470 = vst [vmem:[#allocation2 + $0x118] sm:$0xff] 0.0
          %471 = vst [vmem:[#allocation2 + $0x120] sm:$0xff] 0.0
          %472 = vst [vmem:[#allocation2 + $0x128] sm:$0xff] 0.0
          %473 = vst [vmem:[#allocation2 + $0x130] sm:$0xff] 0.0
          %474 = vst [vmem:[#allocation2 + $0x138] sm:$0xff] 0.0
          %475 = vst [vmem:[#allocation2 + $0x140] sm:$0xff] 0.0
          %476 = vst [vmem:[#allocation2 + $0x148] sm:$0xff] 0.0
          %477 = vst [vmem:[#allocation2 + $0x150] sm:$0xff] 0.0
          %478 = vst [vmem:[#allocation2 + $0x158] sm:$0xff] 0.0
          %479 = vst [vmem:[#allocation2 + $0x160] sm:$0xff] 0.0
          %480 = vst [vmem:[#allocation2 + $0x168] sm:$0xff] 0.0
          %481 = vst [vmem:[#allocation2 + $0x170] sm:$0xff] 0.0
          %482 = vst [vmem:[#allocation2 + $0x178] sm:$0xff] 0.0
          %483 = vst [vmem:[#allocation2 + $0x180] sm:$0xff] 0.0
          %484 = vst [vmem:[#allocation2 + $0x188] sm:$0xff] 0.0
          %485 = vst [vmem:[#allocation2 + $0x190] sm:$0xff] 0.0
        $region68: #{tpu_custom_call.1} parent=43 // pred_fallthru
          _
        %v486 = vld [vmem:[#allocation2] sm:$0xff]
        %v487 = vld [vmem:[#allocation2 + $0x8] sm:$0xff]
        %v488 = vld [vmem:[#allocation2 + $0x10] sm:$0xff]
        %v489 = vld [vmem:[#allocation2 + $0x18] sm:$0xff]
        %v490 = vld [vmem:[#allocation2 + $0x20] sm:$0xff]
        %v491 = vld [vmem:[#allocation2 + $0x28] sm:$0xff]
        %v492 = vld [vmem:[#allocation2 + $0x30] sm:$0xff]
        %v493 = vld [vmem:[#allocation2 + $0x38] sm:$0xff]
        %v494 = vld [vmem:[#allocation2 + $0x40] sm:$0xff]
        %v495 = vld [vmem:[#allocation2 + $0x48] sm:$0xff]
        %v496 = vld [vmem:[#allocation2 + $0x50] sm:$0xff]
        %v497 = vld [vmem:[#allocation2 + $0x58] sm:$0xff]
        %v498 = vld [vmem:[#allocation2 + $0x60] sm:$0xff]
        %v499 = vld [vmem:[#allocation2 + $0x68] sm:$0xff]
        %v500 = vld [vmem:[#allocation2 + $0x70] sm:$0xff]
        %v501 = vld [vmem:[#allocation2 + $0x78] sm:$0xff]
        %v502 = vld [vmem:[#allocation2 + $0x80] sm:$0xff]
        %v503 = vld [vmem:[#allocation2 + $0x88] sm:$0xff]
        %v504 = vld [vmem:[#allocation2 + $0x90] sm:$0xff]
        %v505 = vld [vmem:[#allocation2 + $0x98] sm:$0xff]
        %v506 = vld [vmem:[#allocation2 + $0xa0] sm:$0xff]
        %v507 = vld [vmem:[#allocation2 + $0xa8] sm:$0xff]
        %v508 = vld [vmem:[#allocation2 + $0xb0] sm:$0xff]
        %v509 = vld [vmem:[#allocation2 + $0xb8] sm:$0xff]
        %v510 = vld [vmem:[#allocation2 + $0xc0] sm:$0xff]
        %v511 = vld [vmem:[#allocation2 + $0xc8] sm:$0xff]
        %v512 = vld [vmem:[#allocation2 + $0xd0] sm:$0xff]
        %v513 = vld [vmem:[#allocation2 + $0xd8] sm:$0xff]
        %v514 = vld [vmem:[#allocation2 + $0xe0] sm:$0xff]
        %v515 = vld [vmem:[#allocation2 + $0xe8] sm:$0xff]
        %v516 = vld [vmem:[#allocation2 + $0xf0] sm:$0xff]
        %v517 = vld [vmem:[#allocation2 + $0xf8] sm:$0xff]
        %v518 = vld [vmem:[#allocation2 + $0x100] sm:$0xff]
        %v519 = vld [vmem:[#allocation2 + $0x108] sm:$0xff]
        %v520 = vld [vmem:[#allocation2 + $0x110] sm:$0xff]
        %v521 = vld [vmem:[#allocation2 + $0x118] sm:$0xff]
        %v522 = vld [vmem:[#allocation2 + $0x120] sm:$0xff]
        %v523 = vld [vmem:[#allocation2 + $0x128] sm:$0xff]
        %v524 = vld [vmem:[#allocation2 + $0x130] sm:$0xff]
        %v525 = vld [vmem:[#allocation2 + $0x138] sm:$0xff]
        %v526 = vld [vmem:[#allocation2 + $0x140] sm:$0xff]
        %v527 = vld [vmem:[#allocation2 + $0x148] sm:$0xff]
        %v528 = vld [vmem:[#allocation2 + $0x150] sm:$0xff]
        %v529 = vld [vmem:[#allocation2 + $0x158] sm:$0xff]
        %v530 = vld [vmem:[#allocation2 + $0x160] sm:$0xff]
        %v531 = vld [vmem:[#allocation2 + $0x168] sm:$0xff]
        %v532 = vld [vmem:[#allocation2 + $0x170] sm:$0xff]
        %v533 = vld [vmem:[#allocation2 + $0x178] sm:$0xff]
        %v534 = vld [vmem:[#allocation2 + $0x180] sm:$0xff]
        %v535 = vld [vmem:[#allocation2 + $0x188] sm:$0xff]
        %v536 = vld [vmem:[#allocation2 + $0x190] sm:$0xff]
        %v537 = vld [vmem:[%s357] sm:$0xff]
        %v538 = vld [vmem:[%s357 + $0x8] sm:$0xff]
        %v539 = vld [vmem:[%s357 + $0x10] sm:$0xff]
        %v540 = vld [vmem:[%s357 + $0x18] sm:$0xff]
        %v541 = vld [vmem:[%s357 + $0x20] sm:$0xff]
        %v542 = vld [vmem:[%s357 + $0x28] sm:$0xff]
        %v543 = vld [vmem:[%s357 + $0x30] sm:$0xff]
        %v544 = vld [vmem:[%s357 + $0x38] sm:$0xff]
        %v545 = vld [vmem:[%s357 + $0x40] sm:$0xff]
        %v546 = vld [vmem:[%s357 + $0x48] sm:$0xff]
        %v547 = vld [vmem:[%s357 + $0x50] sm:$0xff]
        %v548 = vld [vmem:[%s357 + $0x58] sm:$0xff]
        %v549 = vld [vmem:[%s357 + $0x60] sm:$0xff]
        %v550 = vld [vmem:[%s357 + $0x68] sm:$0xff]
        %v551 = vld [vmem:[%s357 + $0x70] sm:$0xff]
        %v552 = vld [vmem:[%s357 + $0x78] sm:$0xff]
        %v553 = vld [vmem:[%s357 + $0x80] sm:$0xff]
        %v554 = vld [vmem:[%s357 + $0x88] sm:$0xff]
        %v555 = vld [vmem:[%s357 + $0x90] sm:$0xff]
        %v556 = vld [vmem:[%s357 + $0x98] sm:$0xff]
        %v557 = vld [vmem:[%s357 + $0xa0] sm:$0xff]
        %v558 = vld [vmem:[%s357 + $0xa8] sm:$0xff]
        %v559 = vld [vmem:[%s357 + $0xb0] sm:$0xff]
        %v560 = vld [vmem:[%s357 + $0xb8] sm:$0xff]
        %v561 = vld [vmem:[%s357 + $0xc0] sm:$0xff]
        %v562 = vld [vmem:[%s357 + $0xc8] sm:$0xff]
        %v563 = vld [vmem:[%s357 + $0xd0] sm:$0xff]
        %v564 = vld [vmem:[%s357 + $0xd8] sm:$0xff]
        %v565 = vld [vmem:[%s357 + $0xe0] sm:$0xff]
        %v566 = vld [vmem:[%s357 + $0xe8] sm:$0xff]
        %v567 = vld [vmem:[%s357 + $0xf0] sm:$0xff]
        %v568 = vld [vmem:[%s357 + $0xf8] sm:$0xff]
        %v569 = vld [vmem:[%s357 + $0x100] sm:$0xff]
        %v570 = vld [vmem:[%s357 + $0x108] sm:$0xff]
        %v571 = vld [vmem:[%s366] sm:$0xff]
        %v572 = vld [vmem:[%s366 + $0x8] sm:$0xff]
        %v573 = vld [vmem:[%s366 + $0x10] sm:$0xff]
        %v574 = vld [vmem:[%s366 + $0x18] sm:$0xff]
        %v575 = vld [vmem:[%s366 + $0x20] sm:$0xff]
        %v576 = vld [vmem:[%s366 + $0x28] sm:$0xff]
        %v577 = vld [vmem:[%s366 + $0x30] sm:$0xff]
        %v578 = vld [vmem:[%s366 + $0x38] sm:$0xff]
        %v579 = vld [vmem:[%s366 + $0x40] sm:$0xff]
        %v580 = vld [vmem:[%s366 + $0x48] sm:$0xff]
        %v581 = vld [vmem:[%s366 + $0x50] sm:$0xff]
        %v582 = vld [vmem:[%s366 + $0x58] sm:$0xff]
        %v583 = vld [vmem:[%s366 + $0x60] sm:$0xff]
        %v584 = vld [vmem:[%s366 + $0x68] sm:$0xff]
        %v585 = vld [vmem:[%s366 + $0x70] sm:$0xff]
        %v586 = vld [vmem:[%s366 + $0x78] sm:$0xff]
        %v587 = vld [vmem:[%s366 + $0x80] sm:$0xff]
        %v588 = vld [vmem:[%s366 + $0x88] sm:$0xff]
        %v589 = vld [vmem:[%s366 + $0x90] sm:$0xff]
        %v590 = vld [vmem:[%s366 + $0x98] sm:$0xff]
        %v591 = vld [vmem:[%s366 + $0xa0] sm:$0xff]
        %v592 = vld [vmem:[%s366 + $0xa8] sm:$0xff]
        %v593 = vld [vmem:[%s366 + $0xb0] sm:$0xff]
        %v594 = vld [vmem:[%s366 + $0xb8] sm:$0xff]
        %v595 = vld [vmem:[%s366 + $0xc0] sm:$0xff]
        %v596 = vld [vmem:[%s366 + $0xc8] sm:$0xff]
        %v597 = vld [vmem:[%s366 + $0xd0] sm:$0xff]
        %v598 = vld [vmem:[%s366 + $0xd8] sm:$0xff]
        %v599 = vld [vmem:[%s366 + $0xe0] sm:$0xff]
        %v600 = vld [vmem:[%s366 + $0xe8] sm:$0xff]
        %v601 = vld [vmem:[%s366 + $0xf0] sm:$0xff]
        %v602 = vld [vmem:[%s366 + $0xf8] sm:$0xff]
        %v603 = vld [vmem:[%s366 + $0x100] sm:$0xff]
        %v604 = vld [vmem:[%s366 + $0x108] sm:$0xff]
        %v605 = vld [vmem:[%s366 + $0x110] sm:$0xff]
        %v606 = vld [vmem:[%s366 + $0x118] sm:$0xff]
        %v607 = vld [vmem:[%s366 + $0x120] sm:$0xff]
        %v608 = vld [vmem:[%s366 + $0x128] sm:$0xff]
        %v609 = vld [vmem:[%s366 + $0x130] sm:$0xff]
        %v610 = vld [vmem:[%s366 + $0x138] sm:$0xff]
        %v611 = vld [vmem:[%s366 + $0x140] sm:$0xff]
        %v612 = vld [vmem:[%s366 + $0x148] sm:$0xff]
        %v613 = vld [vmem:[%s366 + $0x150] sm:$0xff]
        %v614 = vld [vmem:[%s366 + $0x158] sm:$0xff]
        %v615 = vld [vmem:[%s366 + $0x160] sm:$0xff]
        %v616 = vld [vmem:[%s366 + $0x168] sm:$0xff]
        %v617 = vld [vmem:[%s366 + $0x170] sm:$0xff]
        %v618 = vld [vmem:[%s366 + $0x178] sm:$0xff]
        %v619 = vld [vmem:[%s366 + $0x180] sm:$0xff]
        %v620 = vld [vmem:[%s366 + $0x188] sm:$0xff]
        %v621 = vld [vmem:[%s366 + $0x190] sm:$0xff]
        %v622 = vld [vmem:[%s366 + $0x198] sm:$0xff]
        %v623 = vld [vmem:[%s366 + $0x1a0] sm:$0xff]
        %v624 = vld [vmem:[%s366 + $0x1a8] sm:$0xff]
        %v625 = vld [vmem:[%s366 + $0x1b0] sm:$0xff]
        %v626 = vld [vmem:[%s366 + $0x1b8] sm:$0xff]
        %v627 = vld [vmem:[%s366 + $0x1c0] sm:$0xff]
        %v628 = vld [vmem:[%s366 + $0x1c8] sm:$0xff]
        %v629 = vld [vmem:[%s366 + $0x1d0] sm:$0xff]
        %v630 = vld [vmem:[%s366 + $0x1d8] sm:$0xff]
        %v631 = vld [vmem:[%s366 + $0x1e0] sm:$0xff]
        %v632 = vld [vmem:[%s366 + $0x1e8] sm:$0xff]
        %v633 = vld [vmem:[%s366 + $0x1f0] sm:$0xff]
        %v634 = vld [vmem:[%s366 + $0x1f8] sm:$0xff]
        %v635 = vld [vmem:[%s366 + $0x200] sm:$0xff]
        %v636 = vld [vmem:[%s366 + $0x208] sm:$0xff]
        %v637 = vld [vmem:[%s366 + $0x210] sm:$0xff]
        %v638 = vld [vmem:[%s366 + $0x218] sm:$0xff]
        %v639 = vld [vmem:[%s366 + $0x220] sm:$0xff]
        %v640 = vld [vmem:[%s366 + $0x228] sm:$0xff]
        %v641 = vld [vmem:[%s366 + $0x230] sm:$0xff]
        %v642 = vld [vmem:[%s366 + $0x238] sm:$0xff]
        %v643 = vld [vmem:[%s366 + $0x240] sm:$0xff]
        %v644 = vld [vmem:[%s366 + $0x248] sm:$0xff]
        %v645 = vld [vmem:[%s366 + $0x250] sm:$0xff]
        %v646 = vld [vmem:[%s366 + $0x258] sm:$0xff]
        %v647 = vld [vmem:[%s366 + $0x260] sm:$0xff]
        %v648 = vld [vmem:[%s366 + $0x268] sm:$0xff]
        %v649 = vld [vmem:[%s366 + $0x270] sm:$0xff]
        %v650 = vld [vmem:[%s366 + $0x278] sm:$0xff]
        %v651 = vld [vmem:[%s366 + $0x280] sm:$0xff]
        %v652 = vld [vmem:[%s366 + $0x288] sm:$0xff]
        %v653 = vld [vmem:[%s366 + $0x290] sm:$0xff]
        %v654 = vld [vmem:[%s366 + $0x298] sm:$0xff]
        %v655 = vld [vmem:[%s366 + $0x2a0] sm:$0xff]
        %v656 = vld [vmem:[%s366 + $0x2a8] sm:$0xff]
        %v657 = vld [vmem:[%s366 + $0x2b0] sm:$0xff]
        %v658 = vld [vmem:[%s366 + $0x2b8] sm:$0xff]
        %v659 = vld [vmem:[%s366 + $0x2c0] sm:$0xff]
        %v660 = vld [vmem:[%s366 + $0x2c8] sm:$0xff]
        %v661 = vld [vmem:[%s366 + $0x2d0] sm:$0xff]
        %v662 = vld [vmem:[%s366 + $0x2d8] sm:$0xff]
        %v663 = vld [vmem:[%s366 + $0x2e0] sm:$0xff]
        %v664 = vld [vmem:[%s366 + $0x2e8] sm:$0xff]
        %v665 = vld [vmem:[%s366 + $0x2f0] sm:$0xff]
        %v666 = vld [vmem:[%s366 + $0x2f8] sm:$0xff]
        %667 = vmatprep.subr.mxu0 %v572
        %668 = vmatpush1.msra.mxu0 %v571
        %669 = vmatprep.subr.mxu0 %v575
        %670 = vmatpush1.msra.mxu0 %v574
        %671 = vmatprep.subr.mxu0 %v578
        %672 = vmatpush1.msra.mxu0 %v577
        %673 = vmatprep.subr.mxu0 %v581
        %674 = vmatpush1.msra.mxu0 %v580
        %675 = vmatprep.subr.mxu0 %v584
        %676 = vmatpush1.msra.mxu0 %v583
        %677 = vmatprep.subr.mxu0 %v587
        %678 = vmatpush1.msra.mxu0 %v586
        %679 = vmatprep.subr.mxu0 %v590
        %680 = vmatpush1.msra.mxu0 %v589
        %681 = vmatprep.subr.mxu0 %v593
        %682 = vmatpush1.msra.mxu0 %v592
        %683 = vmatprep.subr.mxu0 %v596
        %684 = vmatpush1.msra.mxu0 %v595
        %685 = vmatprep.subr.mxu0 %v599
        %686 = vmatpush1.msra.mxu0 %v598
        %687 = vmatprep.subr.mxu0 %v602
        %688 = vmatpush1.msra.mxu0 %v601
        %689 = vmatprep.subr.mxu0 %v605
        %690 = vmatpush1.msra.mxu0 %v604
        %691 = vmatprep.subr.mxu0 %v608
        %692 = vmatpush1.msra.mxu0 %v607
        %693 = vmatprep.subr.mxu0 %v611
        %694 = vmatpush1.msra.mxu0 %v610
        %695 = vmatprep.subr.mxu0 %v614
        %696 = vmatpush1.msra.mxu0 %v613
        %697 = vmatprep.subr.mxu0 %v617
        %698 = vmatpush1.msra.mxu0 %v616
        %699 = vmatprep.subr.mxu0 %v620
        %700 = vmatpush1.msra.mxu0 %v619
        %701 = vmatprep.subr.mxu0 %v623
        %702 = vmatpush1.msra.mxu0 %v622
        %703 = vmatprep.subr.mxu0 %v626
        %704 = vmatpush1.msra.mxu0 %v625
        %705 = vmatprep.subr.mxu0 %v629
        %706 = vmatpush1.msra.mxu0 %v628
        %707 = vmatprep.subr.mxu0 %v632
        %708 = vmatpush1.msra.mxu0 %v631
        %709 = vmatprep.subr.mxu0 %v635
        %710 = vmatpush1.msra.mxu0 %v634
        %711 = vmatprep.subr.mxu0 %v638
        %712 = vmatpush1.msra.mxu0 %v637
        %713 = vmatprep.subr.mxu0 %v641
        %714 = vmatpush1.msra.mxu0 %v640
        %715 = vmatprep.subr.mxu0 %v644
        %716 = vmatpush1.msra.mxu0 %v643
        %717 = vmatprep.subr.mxu0 %v647
        %718 = vmatpush1.msra.mxu0 %v646
        %719 = vmatprep.subr.mxu0 %v650
        %720 = vmatpush1.msra.mxu0 %v649
        %721 = vmatprep.subr.mxu0 %v653
        %722 = vmatpush1.msra.mxu0 %v652
        %723 = vmatprep.subr.mxu0 %v656
        %724 = vmatpush1.msra.mxu0 %v655
        %725 = vmatprep.subr.mxu0 %v659
        %726 = vmatpush1.msra.mxu0 %v658
        %727 = vmatprep.subr.mxu0 %v662
        %728 = vmatpush1.msra.mxu0 %v661
        %729 = vmatprep.subr.mxu0 %v665
        %730 = vmatpush1.msra.mxu0 %v664
        %731 = vmatprep.mubr.f32.mxu0 %v538
        %732 = vmatmul.mubr.f32.gmra.mrb[0].mxu0 %v537
        %v733 = vpop.f32.mrb[0].mxu0
        %v734 = vadd.f32 0.0, %v733
        %v735 = vpop.f32.mrb[0].mxu0
        %v736 = vadd.f32 0.0, %v735
        %737 = vmatprep.mubr.f32.mxu0 %v540
        %738 = vmatmul.mubr.f32.gmra.mrb[0].mxu0 %v539
        %v739 = vpop.f32.mrb[0].mxu0
        %v740 = vadd.f32 0.0, %v739
        %v741 = vpop.f32.mrb[0].mxu0
        %v742 = vadd.f32 0.0, %v741
        %743 = vmatprep.mubr.f32.mxu0 %v542
        %744 = vmatmul.mubr.f32.gmra.mrb[0].mxu0 %v541
        %v745 = vpop.f32.mrb[0].mxu0
        %v746 = vadd.f32 0.0, %v745
        %v747 = vpop.f32.mrb[0].mxu0
        %v748 = vadd.f32 0.0, %v747
        %749 = vmatprep.mubr.f32.mxu0 %v544
        %750 = vmatmul.mubr.f32.gmra.mrb[0].mxu0 %v543
        %v751 = vpop.f32.mrb[0].mxu0
        %v752 = vadd.f32 0.0, %v751
        %v753 = vpop.f32.mrb[0].mxu0
        %v754 = vadd.f32 0.0, %v753
        %755 = vmatprep.mubr.f32.mxu0 %v546
        %756 = vmatmul.mubr.f32.gmra.mrb[0].mxu0 %v545
        %v757 = vpop.f32.mrb[0].mxu0
        %v758 = vadd.f32 0.0, %v757
        %v759 = vpop.f32.mrb[0].mxu0
        %v760 = vadd.f32 0.0, %v759
        %761 = vmatprep.mubr.f32.mxu0 %v548
        %762 = vmatmul.mubr.f32.gmra.mrb[0].mxu0 %v547
        %v763 = vpop.f32.mrb[0].mxu0
        %v764 = vadd.f32 0.0, %v763
        %v765 = vpop.f32.mrb[0].mxu0
        %v766 = vadd.f32 0.0, %v765
        %767 = vmatprep.mubr.f32.mxu0 %v550
        %768 = vmatmul.mubr.f32.gmra.mrb[0].mxu0 %v549
        %v769 = vpop.f32.mrb[0].mxu0
        %v770 = vadd.f32 0.0, %v769
        %v771 = vpop.f32.mrb[0].mxu0
        %v772 = vadd.f32 0.0, %v771
        %773 = vmatprep.mubr.f32.mxu0 %v552
        %774 = vmatmul.mubr.f32.gmra.mrb[0].mxu0 %v551
        %v775 = vpop.f32.mrb[0].mxu0
        %v776 = vadd.f32 0.0, %v775
        %v777 = vpop.f32.mrb[0].mxu0
        %v778 = vadd.f32 0.0, %v777
        %779 = vmatprep.mubr.f32.mxu0 %v554
        %780 = vmatmul.mubr.f32.gmra.mrb[0].mxu0 %v553
        %v781 = vpop.f32.mrb[0].mxu0
        %v782 = vadd.f32 0.0, %v781
        %v783 = vpop.f32.mrb[0].mxu0
        %v784 = vadd.f32 0.0, %v783
        %785 = vmatprep.mubr.f32.mxu0 %v556
        %786 = vmatmul.mubr.f32.gmra.mrb[0].mxu0 %v555
        %v787 = vpop.f32.mrb[0].mxu0
        %v788 = vadd.f32 0.0, %v787
        %v789 = vpop.f32.mrb[0].mxu0
        %v790 = vadd.f32 0.0, %v789
        %791 = vmatprep.mubr.f32.mxu0 %v558
        %792 = vmatmul.mubr.f32.gmra.mrb[0].mxu0 %v557
        %v793 = vpop.f32.mrb[0].mxu0
        %v794 = vadd.f32 0.0, %v793
        %v795 = vpop.f32.mrb[0].mxu0
        %v796 = vadd.f32 0.0, %v795
        %797 = vmatprep.mubr.f32.mxu0 %v560
        %798 = vmatmul.mubr.f32.gmra.mrb[0].mxu0 %v559
        %v799 = vpop.f32.mrb[0].mxu0
        %v800 = vadd.f32 0.0, %v799
        %v801 = vpop.f32.mrb[0].mxu0
        %v802 = vadd.f32 0.0, %v801
        %803 = vmatprep.mubr.f32.mxu0 %v562
        %804 = vmatmul.mubr.f32.gmra.mrb[0].mxu0 %v561
        %v805 = vpop.f32.mrb[0].mxu0
        %v806 = vadd.f32 0.0, %v805
        %v807 = vpop.f32.mrb[0].mxu0
        %v808 = vadd.f32 0.0, %v807
        %809 = vmatprep.mubr.f32.mxu0 %v564
        %810 = vmatmul.mubr.f32.gmra.mrb[0].mxu0 %v563
        %v811 = vpop.f32.mrb[0].mxu0
        %v812 = vadd.f32 0.0, %v811
        %v813 = vpop.f32.mrb[0].mxu0
        %v814 = vadd.f32 0.0, %v813
        %815 = vmatprep.mubr.f32.mxu0 %v566
        %816 = vmatmul.mubr.f32.gmra.mrb[0].mxu0 %v565
        %v817 = vpop.f32.mrb[0].mxu0
        %v818 = vadd.f32 0.0, %v817
        %v819 = vpop.f32.mrb[0].mxu0
        %v820 = vadd.f32 0.0, %v819
        %821 = vmatprep.mubr.f32.mxu0 %v568
        %822 = vmatmul.mubr.f32.gmra.mrb[0].mxu0 %v567
        %v823 = vpop.f32.mrb[0].mxu0
        %v824 = vadd.f32 0.0, %v823
        %v825 = vpop.f32.mrb[0].mxu0
        %v826 = vadd.f32 0.0, %v825
        %827 = vmatprep.mubr.f32.mxu0 %v570
        %828 = vmatmul.mubr.f32.gmra.mrb[0].mxu0 %v569
        %v829 = vpop.f32.mrb[0].mxu0
        %v830 = vadd.f32 0.0, %v829
        %v831 = vpop.f32.mrb[0].mxu0
        %v832 = vadd.f32 0.0, %v831
        %833 = vdwg.mxu0
        %834 = vmatprep.subr.mxu0 0.0
        %835 = vmatpush1.msra.mxu0 %v573
        %836 = vmatprep.subr.mxu0 0.0
        %837 = vmatpush1.msra.mxu0 %v576
        %838 = vmatprep.subr.mxu0 0.0
        %839 = vmatpush1.msra.mxu0 %v579
        %840 = vmatprep.subr.mxu0 0.0
        %841 = vmatpush1.msra.mxu0 %v582
        %842 = vmatprep.subr.mxu0 0.0
        %843 = vmatpush1.msra.mxu0 %v585
        %844 = vmatprep.subr.mxu0 0.0
        %845 = vmatpush1.msra.mxu0 %v588
        %846 = vmatprep.subr.mxu0 0.0
        %847 = vmatpush1.msra.mxu0 %v591
        %848 = vmatprep.subr.mxu0 0.0
        %849 = vmatpush1.msra.mxu0 %v594
        %850 = vmatprep.subr.mxu0 0.0
        %851 = vmatpush1.msra.mxu0 %v597
        %852 = vmatprep.subr.mxu0 0.0
        %853 = vmatpush1.msra.mxu0 %v600
        %854 = vmatprep.subr.mxu0 0.0
        %855 = vmatpush1.msra.mxu0 %v603
        %856 = vmatprep.subr.mxu0 0.0
        %857 = vmatpush1.msra.mxu0 %v606
        %858 = vmatprep.subr.mxu0 0.0
        %859 = vmatpush1.msra.mxu0 %v609
        %860 = vmatprep.subr.mxu0 0.0
        %861 = vmatpush1.msra.mxu0 %v612
        %862 = vmatprep.subr.mxu0 0.0
        %863 = vmatpush1.msra.mxu0 %v615
        %864 = vmatprep.subr.mxu0 0.0
        %865 = vmatpush1.msra.mxu0 %v618
        %866 = vmatprep.subr.mxu0 0.0
        %867 = vmatpush1.msra.mxu0 %v621
        %868 = vmatprep.subr.mxu0 0.0
        %869 = vmatpush1.msra.mxu0 %v624
        %870 = vmatprep.subr.mxu0 0.0
        %871 = vmatpush1.msra.mxu0 %v627
        %872 = vmatprep.subr.mxu0 0.0
        %873 = vmatpush1.msra.mxu0 %v630
        %874 = vmatprep.subr.mxu0 0.0
        %875 = vmatpush1.msra.mxu0 %v633
        %876 = vmatprep.subr.mxu0 0.0
        %877 = vmatpush1.msra.mxu0 %v636
        %878 = vmatprep.subr.mxu0 0.0
        %879 = vmatpush1.msra.mxu0 %v639
        %880 = vmatprep.subr.mxu0 0.0
        %881 = vmatpush1.msra.mxu0 %v642
        %882 = vmatprep.subr.mxu0 0.0
        %883 = vmatpush1.msra.mxu0 %v645
        %884 = vmatprep.subr.mxu0 0.0
        %885 = vmatpush1.msra.mxu0 %v648
        %886 = vmatprep.subr.mxu0 0.0
        %887 = vmatpush1.msra.mxu0 %v651
        %888 = vmatprep.subr.mxu0 0.0
        %889 = vmatpush1.msra.mxu0 %v654
        %890 = vmatprep.subr.mxu0 0.0
        %891 = vmatpush1.msra.mxu0 %v657
        %892 = vmatprep.subr.mxu0 0.0
        %893 = vmatpush1.msra.mxu0 %v660
        %894 = vmatprep.subr.mxu0 0.0
        %895 = vmatpush1.msra.mxu0 %v663
        %896 = vmatprep.subr.mxu0 0.0
        %897 = vmatpush1.msra.mxu0 %v666
        %898 = vmatprep.mubr.f32.mxu0 %v538
        %899 = vmatmul.mubr.f32.gmra.mrb[0].mxu0 %v537
        %v900 = vpop.f32.mrb[0].mxu0
        %v901 = vadd.f32 0.0, %v900
        %v902 = vpop.f32.mrb[0].mxu0
        %903 = vmatprep.mubr.f32.mxu0 %v540
        %904 = vmatmul.mubr.f32.gmra.mrb[0].mxu0 %v539
        %v905 = vpop.f32.mrb[0].mxu0
        %v906 = vadd.f32 0.0, %v905
        %v907 = vpop.f32.mrb[0].mxu0
        %908 = vmatprep.mubr.f32.mxu0 %v542
        %909 = vmatmul.mubr.f32.gmra.mrb[0].mxu0 %v541
        %v910 = vpop.f32.mrb[0].mxu0
        %v911 = vadd.f32 0.0, %v910
        %v912 = vpop.f32.mrb[0].mxu0
        %913 = vmatprep.mubr.f32.mxu0 %v544
        %914 = vmatmul.mubr.f32.gmra.mrb[0].mxu0 %v543
        %v915 = vpop.f32.mrb[0].mxu0
        %v916 = vadd.f32 0.0, %v915
        %v917 = vpop.f32.mrb[0].mxu0
        %918 = vmatprep.mubr.f32.mxu0 %v546
        %919 = vmatmul.mubr.f32.gmra.mrb[0].mxu0 %v545
        %v920 = vpop.f32.mrb[0].mxu0
        %v921 = vadd.f32 0.0, %v920
        %v922 = vpop.f32.mrb[0].mxu0
        %923 = vmatprep.mubr.f32.mxu0 %v548
        %924 = vmatmul.mubr.f32.gmra.mrb[0].mxu0 %v547
        %v925 = vpop.f32.mrb[0].mxu0
        %v926 = vadd.f32 0.0, %v925
        %v927 = vpop.f32.mrb[0].mxu0
        %928 = vmatprep.mubr.f32.mxu0 %v550
        %929 = vmatmul.mubr.f32.gmra.mrb[0].mxu0 %v549
        %v930 = vpop.f32.mrb[0].mxu0
        %v931 = vadd.f32 0.0, %v930
        %v932 = vpop.f32.mrb[0].mxu0
        %933 = vmatprep.mubr.f32.mxu0 %v552
        %934 = vmatmul.mubr.f32.gmra.mrb[0].mxu0 %v551
        %v935 = vpop.f32.mrb[0].mxu0
        %v936 = vadd.f32 0.0, %v935
        %v937 = vpop.f32.mrb[0].mxu0
        %938 = vmatprep.mubr.f32.mxu0 %v554
        %939 = vmatmul.mubr.f32.gmra.mrb[0].mxu0 %v553
        %v940 = vpop.f32.mrb[0].mxu0
        %v941 = vadd.f32 0.0, %v940
        %v942 = vpop.f32.mrb[0].mxu0
        %943 = vmatprep.mubr.f32.mxu0 %v556
        %944 = vmatmul.mubr.f32.gmra.mrb[0].mxu0 %v555
        %v945 = vpop.f32.mrb[0].mxu0
        %v946 = vadd.f32 0.0, %v945
        %v947 = vpop.f32.mrb[0].mxu0
        %948 = vmatprep.mubr.f32.mxu0 %v558
        %949 = vmatmul.mubr.f32.gmra.mrb[0].mxu0 %v557
        %v950 = vpop.f32.mrb[0].mxu0
        %v951 = vadd.f32 0.0, %v950
        %v952 = vpop.f32.mrb[0].mxu0
        %953 = vmatprep.mubr.f32.mxu0 %v560
        %954 = vmatmul.mubr.f32.gmra.mrb[0].mxu0 %v559
        %v955 = vpop.f32.mrb[0].mxu0
        %v956 = vadd.f32 0.0, %v955
        %v957 = vpop.f32.mrb[0].mxu0
        %958 = vmatprep.mubr.f32.mxu0 %v562
        %959 = vmatmul.mubr.f32.gmra.mrb[0].mxu0 %v561
        %v960 = vpop.f32.mrb[0].mxu0
        %v961 = vadd.f32 0.0, %v960
        %v962 = vpop.f32.mrb[0].mxu0
        %963 = vmatprep.mubr.f32.mxu0 %v564
        %964 = vmatmul.mubr.f32.gmra.mrb[0].mxu0 %v563
        %v965 = vpop.f32.mrb[0].mxu0
        %v966 = vadd.f32 0.0, %v965
        %v967 = vpop.f32.mrb[0].mxu0
        %968 = vmatprep.mubr.f32.mxu0 %v566
        %969 = vmatmul.mubr.f32.gmra.mrb[0].mxu0 %v565
        %v970 = vpop.f32.mrb[0].mxu0
        %v971 = vadd.f32 0.0, %v970
        %v972 = vpop.f32.mrb[0].mxu0
        %973 = vmatprep.mubr.f32.mxu0 %v568
        %974 = vmatmul.mubr.f32.gmra.mrb[0].mxu0 %v567
        %v975 = vpop.f32.mrb[0].mxu0
        %v976 = vadd.f32 0.0, %v975
        %v977 = vpop.f32.mrb[0].mxu0
        %978 = vmatprep.mubr.f32.mxu0 %v570
        %979 = vmatmul.mubr.f32.gmra.mrb[0].mxu0 %v569
        %v980 = vpop.f32.mrb[0].mxu0
        %v981 = vadd.f32 0.0, %v980
        %v982 = vpop.f32.mrb[0].mxu0
        %983 = vdwg.mxu0
        %v984 = vadd.f32 %v486, %v734
        %v985 = vadd.f32 %v487, %v736
        %v986 = vadd.f32 %v488, %v901
        %v987 = vadd.f32 %v489, %v740
        %v988 = vadd.f32 %v490, %v742
        %v989 = vadd.f32 %v491, %v906
        %v990 = vadd.f32 %v492, %v746
        %v991 = vadd.f32 %v493, %v748
        %v992 = vadd.f32 %v494, %v911
        %v993 = vadd.f32 %v495, %v752
        %v994 = vadd.f32 %v496, %v754
        %v995 = vadd.f32 %v497, %v916
        %v996 = vadd.f32 %v498, %v758
        %v997 = vadd.f32 %v499, %v760
        %v998 = vadd.f32 %v500, %v921
        %v999 = vadd.f32 %v501, %v764
        %v1000 = vadd.f32 %v502, %v766
        %v1001 = vadd.f32 %v503, %v926
        %v1002 = vadd.f32 %v504, %v770
        %v1003 = vadd.f32 %v505, %v772
        %v1004 = vadd.f32 %v506, %v931
        %v1005 = vadd.f32 %v507, %v776
        %v1006 = vadd.f32 %v508, %v778
        %v1007 = vadd.f32 %v509, %v936
        %v1008 = vadd.f32 %v510, %v782
        %v1009 = vadd.f32 %v511, %v784
        %v1010 = vadd.f32 %v512, %v941
        %v1011 = vadd.f32 %v513, %v788
        %v1012 = vadd.f32 %v514, %v790
        %v1013 = vadd.f32 %v515, %v946
        %v1014 = vadd.f32 %v516, %v794
        %v1015 = vadd.f32 %v517, %v796
        %v1016 = vadd.f32 %v518, %v951
        %v1017 = vadd.f32 %v519, %v800
        %v1018 = vadd.f32 %v520, %v802
        %v1019 = vadd.f32 %v521, %v956
        %v1020 = vadd.f32 %v522, %v806
        %v1021 = vadd.f32 %v523, %v808
        %v1022 = vadd.f32 %v524, %v961
        %v1023 = vadd.f32 %v525, %v812
        %v1024 = vadd.f32 %v526, %v814
        %v1025 = vadd.f32 %v527, %v966
        %v1026 = vadd.f32 %v528, %v818
        %v1027 = vadd.f32 %v529, %v820
        %v1028 = vadd.f32 %v530, %v971
        %v1029 = vadd.f32 %v531, %v824
        %v1030 = vadd.f32 %v532, %v826
        %v1031 = vadd.f32 %v533, %v976
        %v1032 = vadd.f32 %v534, %v830
        %v1033 = vadd.f32 %v535, %v832
        %v1034 = vadd.f32 %v536, %v981
        %1035 = vst [vmem:[#allocation2] sm:$0xff] %v984
        %1036 = vst [vmem:[#allocation2 + $0x8] sm:$0xff] %v985
        %1037 = vst [vmem:[#allocation2 + $0x10] sm:$0xff] %v986
        %1038 = vst [vmem:[#allocation2 + $0x18] sm:$0xff] %v987
        %1039 = vst [vmem:[#allocation2 + $0x20] sm:$0xff] %v988
        %1040 = vst [vmem:[#allocation2 + $0x28] sm:$0xff] %v989
        %1041 = vst [vmem:[#allocation2 + $0x30] sm:$0xff] %v990
        %1042 = vst [vmem:[#allocation2 + $0x38] sm:$0xff] %v991
        %1043 = vst [vmem:[#allocation2 + $0x40] sm:$0xff] %v992
        %1044 = vst [vmem:[#allocation2 + $0x48] sm:$0xff] %v993
        %1045 = vst [vmem:[#allocation2 + $0x50] sm:$0xff] %v994
        %1046 = vst [vmem:[#allocation2 + $0x58] sm:$0xff] %v995
        %1047 = vst [vmem:[#allocation2 + $0x60] sm:$0xff] %v996
        %1048 = vst [vmem:[#allocation2 + $0x68] sm:$0xff] %v997
        %1049 = vst [vmem:[#allocation2 + $0x70] sm:$0xff] %v998
        %1050 = vst [vmem:[#allocation2 + $0x78] sm:$0xff] %v999
        %1051 = vst [vmem:[#allocation2 + $0x80] sm:$0xff] %v1000
        %1052 = vst [vmem:[#allocation2 + $0x88] sm:$0xff] %v1001
        %1053 = vst [vmem:[#allocation2 + $0x90] sm:$0xff] %v1002
        %1054 = vst [vmem:[#allocation2 + $0x98] sm:$0xff] %v1003
        %1055 = vst [vmem:[#allocation2 + $0xa0] sm:$0xff] %v1004
        %1056 = vst [vmem:[#allocation2 + $0xa8] sm:$0xff] %v1005
        %1057 = vst [vmem:[#allocation2 + $0xb0] sm:$0xff] %v1006
        %1058 = vst [vmem:[#allocation2 + $0xb8] sm:$0xff] %v1007
        %1059 = vst [vmem:[#allocation2 + $0xc0] sm:$0xff] %v1008
        %1060 = vst [vmem:[#allocation2 + $0xc8] sm:$0xff] %v1009
        %1061 = vst [vmem:[#allocation2 + $0xd0] sm:$0xff] %v1010
        %1062 = vst [vmem:[#allocation2 + $0xd8] sm:$0xff] %v1011
        %1063 = vst [vmem:[#allocation2 + $0xe0] sm:$0xff] %v1012
        %1064 = vst [vmem:[#allocation2 + $0xe8] sm:$0xff] %v1013
        %1065 = vst [vmem:[#allocation2 + $0xf0] sm:$0xff] %v1014
        %1066 = vst [vmem:[#allocation2 + $0xf8] sm:$0xff] %v1015
        %1067 = vst [vmem:[#allocation2 + $0x100] sm:$0xff] %v1016
        %1068 = vst [vmem:[#allocation2 + $0x108] sm:$0xff] %v1017
        %1069 = vst [vmem:[#allocation2 + $0x110] sm:$0xff] %v1018
        %1070 = vst [vmem:[#allocation2 + $0x118] sm:$0xff] %v1019
        %1071 = vst [vmem:[#allocation2 + $0x120] sm:$0xff] %v1020
        %1072 = vst [vmem:[#allocation2 + $0x128] sm:$0xff] %v1021
        %1073 = vst [vmem:[#allocation2 + $0x130] sm:$0xff] %v1022
        %1074 = vst [vmem:[#allocation2 + $0x138] sm:$0xff] %v1023
        %1075 = vst [vmem:[#allocation2 + $0x140] sm:$0xff] %v1024
        %1076 = vst [vmem:[#allocation2 + $0x148] sm:$0xff] %v1025
        %1077 = vst [vmem:[#allocation2 + $0x150] sm:$0xff] %v1026
        %1078 = vst [vmem:[#allocation2 + $0x158] sm:$0xff] %v1027
        %1079 = vst [vmem:[#allocation2 + $0x160] sm:$0xff] %v1028
        %1080 = vst [vmem:[#allocation2 + $0x168] sm:$0xff] %v1029
        %1081 = vst [vmem:[#allocation2 + $0x170] sm:$0xff] %v1030
        %1082 = vst [vmem:[#allocation2 + $0x178] sm:$0xff] %v1031
        %1083 = vst [vmem:[#allocation2 + $0x180] sm:$0xff] %v1032
        %1084 = vst [vmem:[#allocation2 + $0x188] sm:$0xff] %v1033
        %1085 = vst [vmem:[#allocation2 + $0x190] sm:$0xff] %v1034
        %p1086 = scmp.eq.s32.totalorder %s35, 2
        // Predicated region
        $region69: #{tpu_custom_call.1} parent=43 // pred_check
          %p1087 = pneg %p1086
        $region70: #{tpu_custom_call.1} parent=43 // pred_check_branch
          %1089 = sbr.rel (%p1087) target = $region72
        $region71: #{tpu_custom_call.1} parent=43 // pred_region
          %s1090 = sld [smem:[#allocation3]]
          %v1091 = vld [vmem:[%s375] sm:$0xff]
          %v1092 = vld [vmem:[%s375 + $0x8] sm:$0xff]
          %v1093 = vld [vmem:[%s375 + $0x10] sm:$0xff]
          %v1094 = vld [vmem:[%s375 + $0x18] sm:$0xff]
          %v1095 = vld [vmem:[%s375 + $0x20] sm:$0xff]
          %v1096 = vld [vmem:[%s375 + $0x28] sm:$0xff]
          %v1097 = vld [vmem:[%s375 + $0x30] sm:$0xff]
          %v1098 = vld [vmem:[%s375 + $0x38] sm:$0xff]
          %v1099 = vld [vmem:[%s375 + $0x40] sm:$0xff]
          %v1100 = vld [vmem:[%s375 + $0x48] sm:$0xff]
          %v1101 = vld [vmem:[%s375 + $0x50] sm:$0xff]
          %v1102 = vld [vmem:[%s375 + $0x58] sm:$0xff]
          %v1103 = vld [vmem:[%s375 + $0x60] sm:$0xff]
          %v1104 = vld [vmem:[%s375 + $0x68] sm:$0xff]
          %v1105 = vld [vmem:[%s375 + $0x70] sm:$0xff]
          %v1106 = vld [vmem:[%s375 + $0x78] sm:$0xff]
          %v1107 = vld [vmem:[%s375 + $0x80] sm:$0xff]
          %v1108 = vld [vmem:[#allocation10] sm:$0xff]
          %v1109 = vld [vmem:[#allocation10 + $0x8] sm:$0xff]
          %v1110 = vld [vmem:[#allocation10 + $0x10] sm:$0xff]
          %v1111 = vld [vmem:[#allocation10 + $0x18] sm:$0xff]
          %v1112 = vld [vmem:[#allocation10 + $0x20] sm:$0xff]
          %v1113 = vld [vmem:[#allocation10 + $0x28] sm:$0xff]
          %v1114 = vld [vmem:[#allocation10 + $0x30] sm:$0xff]
          %v1115 = vld [vmem:[#allocation10 + $0x38] sm:$0xff]
          %v1116 = vld [vmem:[#allocation10 + $0x40] sm:$0xff]
          %v1117 = vld [vmem:[#allocation10 + $0x48] sm:$0xff]
          %v1118 = vld [vmem:[#allocation10 + $0x50] sm:$0xff]
          %v1119 = vld [vmem:[#allocation10 + $0x58] sm:$0xff]
          %v1120 = vld [vmem:[#allocation10 + $0x60] sm:$0xff]
          %v1121 = vld [vmem:[#allocation10 + $0x68] sm:$0xff]
          %v1122 = vld [vmem:[#allocation10 + $0x70] sm:$0xff]
          %v1123 = vld [vmem:[#allocation10 + $0x78] sm:$0xff]
          %v1124 = vld [vmem:[#allocation10 + $0x80] sm:$0xff]
          %v1125 = vld [vmem:[#allocation10 + $0x88] sm:$0xff]
          %v1126 = vld [vmem:[#allocation10 + $0x90] sm:$0xff]
          %v1127 = vld [vmem:[#allocation10 + $0x98] sm:$0xff]
          %v1128 = vld [vmem:[#allocation10 + $0xa0] sm:$0xff]
          %v1129 = vld [vmem:[#allocation10 + $0xa8] sm:$0xff]
          %v1130 = vld [vmem:[#allocation10 + $0xb0] sm:$0xff]
          %v1131 = vld [vmem:[#allocation10 + $0xb8] sm:$0xff]
          %v1132 = vld [vmem:[#allocation10 + $0xc0] sm:$0xff]
          %v1133 = vld [vmem:[#allocation10 + $0xc8] sm:$0xff]
          %v1134 = vld [vmem:[#allocation10 + $0xd0] sm:$0xff]
          %v1135 = vld [vmem:[#allocation10 + $0xd8] sm:$0xff]
          %v1136 = vld [vmem:[#allocation10 + $0xe0] sm:$0xff]
          %v1137 = vld [vmem:[#allocation10 + $0xe8] sm:$0xff]
          %v1138 = vld [vmem:[#allocation10 + $0xf0] sm:$0xff]
          %v1139 = vld [vmem:[#allocation10 + $0xf8] sm:$0xff]
          %v1140 = vld [vmem:[#allocation10 + $0x100] sm:$0xff]
          %v1141 = vld [vmem:[#allocation10 + $0x108] sm:$0xff]
          %v1142 = vld [vmem:[#allocation10 + $0x110] sm:$0xff]
          %v1143 = vld [vmem:[#allocation10 + $0x118] sm:$0xff]
          %v1144 = vld [vmem:[#allocation10 + $0x120] sm:$0xff]
          %v1145 = vld [vmem:[#allocation10 + $0x128] sm:$0xff]
          %v1146 = vld [vmem:[#allocation10 + $0x130] sm:$0xff]
          %v1147 = vld [vmem:[#allocation10 + $0x138] sm:$0xff]
          %v1148 = vld [vmem:[#allocation10 + $0x140] sm:$0xff]
          %v1149 = vld [vmem:[#allocation10 + $0x148] sm:$0xff]
          %v1150 = vld [vmem:[#allocation10 + $0x150] sm:$0xff]
          %v1151 = vld [vmem:[#allocation10 + $0x158] sm:$0xff]
          %v1152 = vld [vmem:[#allocation10 + $0x160] sm:$0xff]
          %v1153 = vld [vmem:[#allocation10 + $0x168] sm:$0xff]
          %v1154 = vld [vmem:[#allocation10 + $0x170] sm:$0xff]
          %v1155 = vld [vmem:[#allocation10 + $0x178] sm:$0xff]
          %1156 = vmatprep.subr.mxu0 %v1109
          %1157 = vmatpush1.msra.mxu0 %v1108
          %1158 = vmatprep.subr.mxu0 %v1112
          %1159 = vmatpush1.msra.mxu0 %v1111
          %1160 = vmatprep.subr.mxu0 %v1115
          %1161 = vmatpush1.msra.mxu0 %v1114
          %1162 = vmatprep.subr.mxu0 %v1118
          %1163 = vmatpush1.msra.mxu0 %v1117
          %1164 = vmatprep.subr.mxu0 %v1121
          %1165 = vmatpush1.msra.mxu0 %v1120
          %1166 = vmatprep.subr.mxu0 %v1124
          %1167 = vmatpush1.msra.mxu0 %v1123
          %1168 = vmatprep.subr.mxu0 %v1127
          %1169 = vmatpush1.msra.mxu0 %v1126
          %1170 = vmatprep.subr.mxu0 %v1130
          %1171 = vmatpush1.msra.mxu0 %v1129
          %1172 = vmatprep.subr.mxu0 %v1133
          %1173 = vmatpush1.msra.mxu0 %v1132
          %1174 = vmatprep.subr.mxu0 %v1136
          %1175 = vmatpush1.msra.mxu0 %v1135
          %1176 = vmatprep.subr.mxu0 %v1139
          %1177 = vmatpush1.msra.mxu0 %v1138
          %1178 = vmatprep.subr.mxu0 %v1142
          %1179 = vmatpush1.msra.mxu0 %v1141
          %1180 = vmatprep.subr.mxu0 %v1145
          %1181 = vmatpush1.msra.mxu0 %v1144
          %1182 = vmatprep.subr.mxu0 %v1148
          %1183 = vmatpush1.msra.mxu0 %v1147
          %1184 = vmatprep.subr.mxu0 %v1151
          %1185 = vmatpush1.msra.mxu0 %v1150
          %1186 = vmatprep.subr.mxu0 %v1154
          %1187 = vmatpush1.msra.mxu0 %v1153
          %1188 = vmatprep.subr.mxu0 0.0
          %1189 = vmatpush1.msra.mxu0 0.0
          %1190 = vmatprep.subr.mxu0 0.0
          %1191 = vmatpush1.msra.mxu0 0.0
          %1192 = vmatprep.subr.mxu0 0.0
          %1193 = vmatpush1.msra.mxu0 0.0
          %1194 = vmatprep.subr.mxu0 0.0
          %1195 = vmatpush1.msra.mxu0 0.0
          %1196 = vmatprep.subr.mxu0 0.0
          %1197 = vmatpush1.msra.mxu0 0.0
          %1198 = vmatprep.subr.mxu0 0.0
          %1199 = vmatpush1.msra.mxu0 0.0
          %1200 = vmatprep.subr.mxu0 0.0
          %1201 = vmatpush1.msra.mxu0 0.0
          %1202 = vmatprep.subr.mxu0 0.0
          %1203 = vmatpush1.msra.mxu0 0.0
          %1204 = vmatprep.subr.mxu0 0.0
          %1205 = vmatpush1.msra.mxu0 0.0
          %1206 = vmatprep.subr.mxu0 0.0
          %1207 = vmatpush1.msra.mxu0 0.0
          %1208 = vmatprep.subr.mxu0 0.0
          %1209 = vmatpush1.msra.mxu0 0.0
          %1210 = vmatprep.subr.mxu0 0.0
          %1211 = vmatpush1.msra.mxu0 0.0
          %1212 = vmatprep.subr.mxu0 0.0
          %1213 = vmatpush1.msra.mxu0 0.0
          %1214 = vmatprep.subr.mxu0 0.0
          %1215 = vmatpush1.msra.mxu0 0.0
          %1216 = vmatprep.subr.mxu0 0.0
          %1217 = vmatpush1.msra.mxu0 0.0
          %1218 = vmatprep.subr.mxu0 0.0
          %1219 = vmatpush1.msra.mxu0 0.0
          %1220 = vmatprep.mubr.f32.mxu0 0.0
          %1221 = vmatmul.mubr.f32.gmra.mrb[0].mxu0 %v1091
          %v1222 = vpop.f32.mrb[0].mxu0
          %v1223 = vadd.f32 0.0, %v1222
          %v1224 = vpop.f32.mrb[0].mxu0
          %v1225 = vadd.f32 0.0, %v1224
          %1226 = vmatprep.mubr.f32.mxu0 0.0
          %1227 = vmatmul.mubr.f32.gmra.mrb[0].mxu0 %v1092
          %v1228 = vpop.f32.mrb[0].mxu0
          %v1229 = vadd.f32 0.0, %v1228
          %v1230 = vpop.f32.mrb[0].mxu0
          %v1231 = vadd.f32 0.0, %v1230
          %1232 = vmatprep.mubr.f32.mxu0 0.0
          %1233 = vmatmul.mubr.f32.gmra.mrb[0].mxu0 %v1093
          %v1234 = vpop.f32.mrb[0].mxu0
          %v1235 = vadd.f32 0.0, %v1234
          %v1236 = vpop.f32.mrb[0].mxu0
          %v1237 = vadd.f32 0.0, %v1236
          %1238 = vmatprep.mubr.f32.mxu0 0.0
          %1239 = vmatmul.mubr.f32.gmra.mrb[0].mxu0 %v1094
          %v1240 = vpop.f32.mrb[0].mxu0
          %v1241 = vadd.f32 0.0, %v1240
          %v1242 = vpop.f32.mrb[0].mxu0
          %v1243 = vadd.f32 0.0, %v1242
          %1244 = vmatprep.mubr.f32.mxu0 0.0
          %1245 = vmatmul.mubr.f32.gmra.mrb[0].mxu0 %v1095
          %v1246 = vpop.f32.mrb[0].mxu0
          %v1247 = vadd.f32 0.0, %v1246
          %v1248 = vpop.f32.mrb[0].mxu0
          %v1249 = vadd.f32 0.0, %v1248
          %1250 = vmatprep.mubr.f32.mxu0 0.0
          %1251 = vmatmul.mubr.f32.gmra.mrb[0].mxu0 %v1096
          %v1252 = vpop.f32.mrb[0].mxu0
          %v1253 = vadd.f32 0.0, %v1252
          %v1254 = vpop.f32.mrb[0].mxu0
          %v1255 = vadd.f32 0.0, %v1254
          %1256 = vmatprep.mubr.f32.mxu0 0.0
          %1257 = vmatmul.mubr.f32.gmra.mrb[0].mxu0 %v1097
          %v1258 = vpop.f32.mrb[0].mxu0
          %v1259 = vadd.f32 0.0, %v1258
          %v1260 = vpop.f32.mrb[0].mxu0
          %v1261 = vadd.f32 0.0, %v1260
          %1262 = vmatprep.mubr.f32.mxu0 0.0
          %1263 = vmatmul.mubr.f32.gmra.mrb[0].mxu0 %v1098
          %v1264 = vpop.f32.mrb[0].mxu0
          %v1265 = vadd.f32 0.0, %v1264
          %v1266 = vpop.f32.mrb[0].mxu0
          %v1267 = vadd.f32 0.0, %v1266
          %1268 = vmatprep.mubr.f32.mxu0 0.0
          %1269 = vmatmul.mubr.f32.gmra.mrb[0].mxu0 %v1099
          %v1270 = vpop.f32.mrb[0].mxu0
          %v1271 = vadd.f32 0.0, %v1270
          %v1272 = vpop.f32.mrb[0].mxu0
          %v1273 = vadd.f32 0.0, %v1272
          %1274 = vmatprep.mubr.f32.mxu0 0.0
          %1275 = vmatmul.mubr.f32.gmra.mrb[0].mxu0 %v1100
          %v1276 = vpop.f32.mrb[0].mxu0
          %v1277 = vadd.f32 0.0, %v1276
          %v1278 = vpop.f32.mrb[0].mxu0
          %v1279 = vadd.f32 0.0, %v1278
          %1280 = vmatprep.mubr.f32.mxu0 0.0
          %1281 = vmatmul.mubr.f32.gmra.mrb[0].mxu0 %v1101
          %v1282 = vpop.f32.mrb[0].mxu0
          %v1283 = vadd.f32 0.0, %v1282
          %v1284 = vpop.f32.mrb[0].mxu0
          %v1285 = vadd.f32 0.0, %v1284
          %1286 = vmatprep.mubr.f32.mxu0 0.0
          %1287 = vmatmul.mubr.f32.gmra.mrb[0].mxu0 %v1102
          %v1288 = vpop.f32.mrb[0].mxu0
          %v1289 = vadd.f32 0.0, %v1288
          %v1290 = vpop.f32.mrb[0].mxu0
          %v1291 = vadd.f32 0.0, %v1290
          %1292 = vmatprep.mubr.f32.mxu0 0.0
          %1293 = vmatmul.mubr.f32.gmra.mrb[0].mxu0 %v1103
          %v1294 = vpop.f32.mrb[0].mxu0
          %v1295 = vadd.f32 0.0, %v1294
          %v1296 = vpop.f32.mrb[0].mxu0
          %v1297 = vadd.f32 0.0, %v1296
          %1298 = vmatprep.mubr.f32.mxu0 0.0
          %1299 = vmatmul.mubr.f32.gmra.mrb[0].mxu0 %v1104
          %v1300 = vpop.f32.mrb[0].mxu0
          %v1301 = vadd.f32 0.0, %v1300
          %v1302 = vpop.f32.mrb[0].mxu0
          %v1303 = vadd.f32 0.0, %v1302
          %1304 = vmatprep.mubr.f32.mxu0 0.0
          %1305 = vmatmul.mubr.f32.gmra.mrb[0].mxu0 %v1105
          %v1306 = vpop.f32.mrb[0].mxu0
          %v1307 = vadd.f32 0.0, %v1306
          %v1308 = vpop.f32.mrb[0].mxu0
          %v1309 = vadd.f32 0.0, %v1308
          %1310 = vmatprep.mubr.f32.mxu0 0.0
          %1311 = vmatmul.mubr.f32.gmra.mrb[0].mxu0 %v1106
          %v1312 = vpop.f32.mrb[0].mxu0
          %v1313 = vadd.f32 0.0, %v1312
          %v1314 = vpop.f32.mrb[0].mxu0
          %v1315 = vadd.f32 0.0, %v1314
          %1316 = vmatprep.mubr.f32.mxu0 0.0
          %1317 = vmatmul.mubr.f32.gmra.mrb[0].mxu0 %v1107
          %v1318 = vpop.f32.mrb[0].mxu0
          %v1319 = vadd.f32 0.0, %v1318
          %v1320 = vpop.f32.mrb[0].mxu0
          %v1321 = vadd.f32 0.0, %v1320
          %1322 = vdwg.mxu0
          %1323 = vmatprep.subr.mxu0 0.0
          %1324 = vmatpush1.msra.mxu0 %v1110
          %1325 = vmatprep.subr.mxu0 0.0
          %1326 = vmatpush1.msra.mxu0 %v1113
          %1327 = vmatprep.subr.mxu0 0.0
          %1328 = vmatpush1.msra.mxu0 %v1116
          %1329 = vmatprep.subr.mxu0 0.0
          %1330 = vmatpush1.msra.mxu0 %v1119
          %1331 = vmatprep.subr.mxu0 0.0
          %1332 = vmatpush1.msra.mxu0 %v1122
          %1333 = vmatprep.subr.mxu0 0.0
          %1334 = vmatpush1.msra.mxu0 %v1125
          %1335 = vmatprep.subr.mxu0 0.0
          %1336 = vmatpush1.msra.mxu0 %v1128
          %1337 = vmatprep.subr.mxu0 0.0
          %1338 = vmatpush1.msra.mxu0 %v1131
          %1339 = vmatprep.subr.mxu0 0.0
          %1340 = vmatpush1.msra.mxu0 %v1134
          %1341 = vmatprep.subr.mxu0 0.0
          %1342 = vmatpush1.msra.mxu0 %v1137
          %1343 = vmatprep.subr.mxu0 0.0
          %1344 = vmatpush1.msra.mxu0 %v1140
          %1345 = vmatprep.subr.mxu0 0.0
          %1346 = vmatpush1.msra.mxu0 %v1143
          %1347 = vmatprep.subr.mxu0 0.0
          %1348 = vmatpush1.msra.mxu0 %v1146
          %1349 = vmatprep.subr.mxu0 0.0
          %1350 = vmatpush1.msra.mxu0 %v1149
          %1351 = vmatprep.subr.mxu0 0.0
          %1352 = vmatpush1.msra.mxu0 %v1152
          %1353 = vmatprep.subr.mxu0 0.0
          %1354 = vmatpush1.msra.mxu0 %v1155
          %1355 = vmatprep.subr.mxu0 0.0
          %1356 = vmatpush1.msra.mxu0 0.0
          %1357 = vmatprep.subr.mxu0 0.0
          %1358 = vmatpush1.msra.mxu0 0.0
          %1359 = vmatprep.subr.mxu0 0.0
          %1360 = vmatpush1.msra.mxu0 0.0
          %1361 = vmatprep.subr.mxu0 0.0
          %1362 = vmatpush1.msra.mxu0 0.0
          %1363 = vmatprep.subr.mxu0 0.0
          %1364 = vmatpush1.msra.mxu0 0.0
          %1365 = vmatprep.subr.mxu0 0.0
          %1366 = vmatpush1.msra.mxu0 0.0
          %1367 = vmatprep.subr.mxu0 0.0
          %1368 = vmatpush1.msra.mxu0 0.0
          %1369 = vmatprep.subr.mxu0 0.0
          %1370 = vmatpush1.msra.mxu0 0.0
          %1371 = vmatprep.subr.mxu0 0.0
          %1372 = vmatpush1.msra.mxu0 0.0
          %1373 = vmatprep.subr.mxu0 0.0
          %1374 = vmatpush1.msra.mxu0 0.0
          %1375 = vmatprep.subr.mxu0 0.0
          %1376 = vmatpush1.msra.mxu0 0.0
          %1377 = vmatprep.subr.mxu0 0.0
          %1378 = vmatpush1.msra.mxu0 0.0
          %1379 = vmatprep.subr.mxu0 0.0
          %1380 = vmatpush1.msra.mxu0 0.0
          %1381 = vmatprep.subr.mxu0 0.0
          %1382 = vmatpush1.msra.mxu0 0.0
          %1383 = vmatprep.subr.mxu0 0.0
          %1384 = vmatpush1.msra.mxu0 0.0
          %1385 = vmatprep.subr.mxu0 0.0
          %1386 = vmatpush1.msra.mxu0 0.0
          %1387 = vmatprep.mubr.f32.mxu0 0.0
          %1388 = vmatmul.mubr.f32.gmra.mrb[0].mxu0 %v1091
          %v1389 = vpop.f32.mrb[0].mxu0
          %v1390 = vadd.f32 0.0, %v1389
          %v1391 = vpop.f32.mrb[0].mxu0
          %1392 = vmatprep.mubr.f32.mxu0 0.0
          %1393 = vmatmul.mubr.f32.gmra.mrb[0].mxu0 %v1092
          %v1394 = vpop.f32.mrb[0].mxu0
          %v1395 = vadd.f32 0.0, %v1394
          %v1396 = vpop.f32.mrb[0].mxu0
          %1397 = vmatprep.mubr.f32.mxu0 0.0
          %1398 = vmatmul.mubr.f32.gmra.mrb[0].mxu0 %v1093
          %v1399 = vpop.f32.mrb[0].mxu0
          %v1400 = vadd.f32 0.0, %v1399
          %v1401 = vpop.f32.mrb[0].mxu0
          %1402 = vmatprep.mubr.f32.mxu0 0.0
          %1403 = vmatmul.mubr.f32.gmra.mrb[0].mxu0 %v1094
          %v1404 = vpop.f32.mrb[0].mxu0
          %v1405 = vadd.f32 0.0, %v1404
          %v1406 = vpop.f32.mrb[0].mxu0
          %1407 = vmatprep.mubr.f32.mxu0 0.0
          %1408 = vmatmul.mubr.f32.gmra.mrb[0].mxu0 %v1095
          %v1409 = vpop.f32.mrb[0].mxu0
          %v1410 = vadd.f32 0.0, %v1409
          %v1411 = vpop.f32.mrb[0].mxu0
          %1412 = vmatprep.mubr.f32.mxu0 0.0
          %1413 = vmatmul.mubr.f32.gmra.mrb[0].mxu0 %v1096
          %v1414 = vpop.f32.mrb[0].mxu0
          %v1415 = vadd.f32 0.0, %v1414
          %v1416 = vpop.f32.mrb[0].mxu0
          %1417 = vmatprep.mubr.f32.mxu0 0.0
          %1418 = vmatmul.mubr.f32.gmra.mrb[0].mxu0 %v1097
          %v1419 = vpop.f32.mrb[0].mxu0
          %v1420 = vadd.f32 0.0, %v1419
          %v1421 = vpop.f32.mrb[0].mxu0
          %1422 = vmatprep.mubr.f32.mxu0 0.0
          %1423 = vmatmul.mubr.f32.gmra.mrb[0].mxu0 %v1098
          %v1424 = vpop.f32.mrb[0].mxu0
          %v1425 = vadd.f32 0.0, %v1424
          %v1426 = vpop.f32.mrb[0].mxu0
          %1427 = vmatprep.mubr.f32.mxu0 0.0
          %1428 = vmatmul.mubr.f32.gmra.mrb[0].mxu0 %v1099
          %v1429 = vpop.f32.mrb[0].mxu0
          %v1430 = vadd.f32 0.0, %v1429
          %v1431 = vpop.f32.mrb[0].mxu0
          %1432 = vmatprep.mubr.f32.mxu0 0.0
          %1433 = vmatmul.mubr.f32.gmra.mrb[0].mxu0 %v1100
          %v1434 = vpop.f32.mrb[0].mxu0
          %v1435 = vadd.f32 0.0, %v1434
          %v1436 = vpop.f32.mrb[0].mxu0
          %1437 = vmatprep.mubr.f32.mxu0 0.0
          %1438 = vmatmul.mubr.f32.gmra.mrb[0].mxu0 %v1101
          %v1439 = vpop.f32.mrb[0].mxu0
          %v1440 = vadd.f32 0.0, %v1439
          %v1441 = vpop.f32.mrb[0].mxu0
          %1442 = vmatprep.mubr.f32.mxu0 0.0
          %1443 = vmatmul.mubr.f32.gmra.mrb[0].mxu0 %v1102
          %v1444 = vpop.f32.mrb[0].mxu0
          %v1445 = vadd.f32 0.0, %v1444
          %v1446 = vpop.f32.mrb[0].mxu0
          %1447 = vmatprep.mubr.f32.mxu0 0.0
          %1448 = vmatmul.mubr.f32.gmra.mrb[0].mxu0 %v1103
          %v1449 = vpop.f32.mrb[0].mxu0
          %v1450 = vadd.f32 0.0, %v1449
          %v1451 = vpop.f32.mrb[0].mxu0
          %1452 = vmatprep.mubr.f32.mxu0 0.0
          %1453 = vmatmul.mubr.f32.gmra.mrb[0].mxu0 %v1104
          %v1454 = vpop.f32.mrb[0].mxu0
          %v1455 = vadd.f32 0.0, %v1454
          %v1456 = vpop.f32.mrb[0].mxu0
          %1457 = vmatprep.mubr.f32.mxu0 0.0
          %1458 = vmatmul.mubr.f32.gmra.mrb[0].mxu0 %v1105
          %v1459 = vpop.f32.mrb[0].mxu0
          %v1460 = vadd.f32 0.0, %v1459
          %v1461 = vpop.f32.mrb[0].mxu0
          %1462 = vmatprep.mubr.f32.mxu0 0.0
          %1463 = vmatmul.mubr.f32.gmra.mrb[0].mxu0 %v1106
          %v1464 = vpop.f32.mrb[0].mxu0
          %v1465 = vadd.f32 0.0, %v1464
          %v1466 = vpop.f32.mrb[0].mxu0
          %1467 = vmatprep.mubr.f32.mxu0 0.0
          %1468 = vmatmul.mubr.f32.gmra.mrb[0].mxu0 %v1107
          %v1469 = vpop.f32.mrb[0].mxu0
          %v1470 = vadd.f32 0.0, %v1469
          %v1471 = vpop.f32.mrb[0].mxu0
          %1472 = vdwg.mxu0
          %v1473 = vld [vmem:[#allocation2] sm:$0xff]
          %v1474 = vld [vmem:[#allocation2 + $0x8] sm:$0xff]
          %v1475 = vld [vmem:[#allocation2 + $0x10] sm:$0xff]
          %v1476 = vld [vmem:[#allocation2 + $0x18] sm:$0xff]
          %v1477 = vld [vmem:[#allocation2 + $0x20] sm:$0xff]
          %v1478 = vld [vmem:[#allocation2 + $0x28] sm:$0xff]
          %v1479 = vld [vmem:[#allocation2 + $0x30] sm:$0xff]
          %v1480 = vld [vmem:[#allocation2 + $0x38] sm:$0xff]
          %v1481 = vld [vmem:[#allocation2 + $0x40] sm:$0xff]
          %v1482 = vld [vmem:[#allocation2 + $0x48] sm:$0xff]
          %v1483 = vld [vmem:[#allocation2 + $0x50] sm:$0xff]
          %v1484 = vld [vmem:[#allocation2 + $0x58] sm:$0xff]
          %v1485 = vld [vmem:[#allocation2 + $0x60] sm:$0xff]
          %v1486 = vld [vmem:[#allocation2 + $0x68] sm:$0xff]
          %v1487 = vld [vmem:[#allocation2 + $0x70] sm:$0xff]
          %v1488 = vld [vmem:[#allocation2 + $0x78] sm:$0xff]
          %v1489 = vld [vmem:[#allocation2 + $0x80] sm:$0xff]
          %v1490 = vld [vmem:[#allocation2 + $0x88] sm:$0xff]
          %v1491 = vld [vmem:[#allocation2 + $0x90] sm:$0xff]
          %v1492 = vld [vmem:[#allocation2 + $0x98] sm:$0xff]
          %v1493 = vld [vmem:[#allocation2 + $0xa0] sm:$0xff]
          %v1494 = vld [vmem:[#allocation2 + $0xa8] sm:$0xff]
          %v1495 = vld [vmem:[#allocation2 + $0xb0] sm:$0xff]
          %v1496 = vld [vmem:[#allocation2 + $0xb8] sm:$0xff]
          %v1497 = vld [vmem:[#allocation2 + $0xc0] sm:$0xff]
          %v1498 = vld [vmem:[#allocation2 + $0xc8] sm:$0xff]
          %v1499 = vld [vmem:[#allocation2 + $0xd0] sm:$0xff]
          %v1500 = vld [vmem:[#allocation2 + $0xd8] sm:$0xff]
          %v1501 = vld [vmem:[#allocation2 + $0xe0] sm:$0xff]
          %v1502 = vld [vmem:[#allocation2 + $0xe8] sm:$0xff]
          %v1503 = vld [vmem:[#allocation2 + $0xf0] sm:$0xff]
          %v1504 = vld [vmem:[#allocation2 + $0xf8] sm:$0xff]
          %v1505 = vld [vmem:[#allocation2 + $0x100] sm:$0xff]
          %v1506 = vld [vmem:[#allocation2 + $0x108] sm:$0xff]
          %v1507 = vld [vmem:[#allocation2 + $0x110] sm:$0xff]
          %v1508 = vld [vmem:[#allocation2 + $0x118] sm:$0xff]
          %v1509 = vld [vmem:[#allocation2 + $0x120] sm:$0xff]
          %v1510 = vld [vmem:[#allocation2 + $0x128] sm:$0xff]
          %v1511 = vld [vmem:[#allocation2 + $0x130] sm:$0xff]
          %v1512 = vld [vmem:[#allocation2 + $0x138] sm:$0xff]
          %v1513 = vld [vmem:[#allocation2 + $0x140] sm:$0xff]
          %v1514 = vld [vmem:[#allocation2 + $0x148] sm:$0xff]
          %v1515 = vld [vmem:[#allocation2 + $0x150] sm:$0xff]
          %v1516 = vld [vmem:[#allocation2 + $0x158] sm:$0xff]
          %v1517 = vld [vmem:[#allocation2 + $0x160] sm:$0xff]
          %v1518 = vld [vmem:[#allocation2 + $0x168] sm:$0xff]
          %v1519 = vld [vmem:[#allocation2 + $0x170] sm:$0xff]
          %v1520 = vld [vmem:[#allocation2 + $0x178] sm:$0xff]
          %v1521 = vld [vmem:[#allocation2 + $0x180] sm:$0xff]
          %v1522 = vld [vmem:[#allocation2 + $0x188] sm:$0xff]
          %v1523 = vld [vmem:[#allocation2 + $0x190] sm:$0xff]
          %v1524 = vstv %s1090
          %v1525 = vmul.f32 %v1524, %v1473
          %v1526 = vmul.f32 %v1524, %v1474
          %v1527 = vmul.f32 %v1524, %v1475
          %v1528 = vmul.f32 %v1524, %v1476
          %v1529 = vmul.f32 %v1524, %v1477
          %v1530 = vmul.f32 %v1524, %v1478
          %v1531 = vmul.f32 %v1524, %v1479
          %v1532 = vmul.f32 %v1524, %v1480
          %v1533 = vmul.f32 %v1524, %v1481
          %v1534 = vmul.f32 %v1524, %v1482
          %v1535 = vmul.f32 %v1524, %v1483
          %v1536 = vmul.f32 %v1524, %v1484
          %v1537 = vmul.f32 %v1524, %v1485
          %v1538 = vmul.f32 %v1524, %v1486
          %v1539 = vmul.f32 %v1524, %v1487
          %v1540 = vmul.f32 %v1524, %v1488
          %v1541 = vmul.f32 %v1524, %v1489
          %v1542 = vmul.f32 %v1524, %v1490
          %v1543 = vmul.f32 %v1524, %v1491
          %v1544 = vmul.f32 %v1524, %v1492
          %v1545 = vmul.f32 %v1524, %v1493
          %v1546 = vmul.f32 %v1524, %v1494
          %v1547 = vmul.f32 %v1524, %v1495
          %v1548 = vmul.f32 %v1524, %v1496
          %v1549 = vmul.f32 %v1524, %v1497
          %v1550 = vmul.f32 %v1524, %v1498
          %v1551 = vmul.f32 %v1524, %v1499
          %v1552 = vmul.f32 %v1524, %v1500
          %v1553 = vmul.f32 %v1524, %v1501
          %v1554 = vmul.f32 %v1524, %v1502
          %v1555 = vmul.f32 %v1524, %v1503
          %v1556 = vmul.f32 %v1524, %v1504
          %v1557 = vmul.f32 %v1524, %v1505
          %v1558 = vmul.f32 %v1524, %v1506
          %v1559 = vmul.f32 %v1524, %v1507
          %v1560 = vmul.f32 %v1524, %v1508
          %v1561 = vmul.f32 %v1524, %v1509
          %v1562 = vmul.f32 %v1524, %v1510
          %v1563 = vmul.f32 %v1524, %v1511
          %v1564 = vmul.f32 %v1524, %v1512
          %v1565 = vmul.f32 %v1524, %v1513
          %v1566 = vmul.f32 %v1524, %v1514
          %v1567 = vmul.f32 %v1524, %v1515
          %v1568 = vmul.f32 %v1524, %v1516
          %v1569 = vmul.f32 %v1524, %v1517
          %v1570 = vmul.f32 %v1524, %v1518
          %v1571 = vmul.f32 %v1524, %v1519
          %v1572 = vmul.f32 %v1524, %v1520
          %v1573 = vmul.f32 %v1524, %v1521
          %v1574 = vmul.f32 %v1524, %v1522
          %v1575 = vmul.f32 %v1524, %v1523
          %s1576 = ssub.f32 1.0, %s1090
          %v1577 = vstv %s1576
          %v1578 = vmul.f32 %v1577, %v1223
          %v1579 = vmul.f32 %v1577, %v1225
          %v1580 = vmul.f32 %v1577, %v1390
          %v1581 = vmul.f32 %v1577, %v1229
          %v1582 = vmul.f32 %v1577, %v1231
          %v1583 = vmul.f32 %v1577, %v1395
          %v1584 = vmul.f32 %v1577, %v1235
          %v1585 = vmul.f32 %v1577, %v1237
          %v1586 = vmul.f32 %v1577, %v1400
          %v1587 = vmul.f32 %v1577, %v1241
          %v1588 = vmul.f32 %v1577, %v1243
          %v1589 = vmul.f32 %v1577, %v1405
          %v1590 = vmul.f32 %v1577, %v1247
          %v1591 = vmul.f32 %v1577, %v1249
          %v1592 = vmul.f32 %v1577, %v1410
          %v1593 = vmul.f32 %v1577, %v1253
          %v1594 = vmul.f32 %v1577, %v1255
          %v1595 = vmul.f32 %v1577, %v1415
          %v1596 = vmul.f32 %v1577, %v1259
          %v1597 = vmul.f32 %v1577, %v1261
          %v1598 = vmul.f32 %v1577, %v1420
          %v1599 = vmul.f32 %v1577, %v1265
          %v1600 = vmul.f32 %v1577, %v1267
          %v1601 = vmul.f32 %v1577, %v1425
          %v1602 = vmul.f32 %v1577, %v1271
          %v1603 = vmul.f32 %v1577, %v1273
          %v1604 = vmul.f32 %v1577, %v1430
          %v1605 = vmul.f32 %v1577, %v1277
          %v1606 = vmul.f32 %v1577, %v1279
          %v1607 = vmul.f32 %v1577, %v1435
          %v1608 = vmul.f32 %v1577, %v1283
          %v1609 = vmul.f32 %v1577, %v1285
          %v1610 = vmul.f32 %v1577, %v1440
          %v1611 = vmul.f32 %v1577, %v1289
          %v1612 = vmul.f32 %v1577, %v1291
          %v1613 = vmul.f32 %v1577, %v1445
          %v1614 = vmul.f32 %v1577, %v1295
          %v1615 = vmul.f32 %v1577, %v1297
          %v1616 = vmul.f32 %v1577, %v1450
          %v1617 = vmul.f32 %v1577, %v1301
          %v1618 = vmul.f32 %v1577, %v1303
          %v1619 = vmul.f32 %v1577, %v1455
          %v1620 = vmul.f32 %v1577, %v1307
          %v1621 = vmul.f32 %v1577, %v1309
          %v1622 = vmul.f32 %v1577, %v1460
          %v1623 = vmul.f32 %v1577, %v1313
          %v1624 = vmul.f32 %v1577, %v1315
          %v1625 = vmul.f32 %v1577, %v1465
          %v1626 = vmul.f32 %v1577, %v1319
          %v1627 = vmul.f32 %v1577, %v1321
          %v1628 = vmul.f32 %v1577, %v1470
          %v1629 = vadd.f32 %v1525, %v1578
          %v1630 = vadd.f32 %v1526, %v1579
          %v1631 = vadd.f32 %v1527, %v1580
          %v1632 = vadd.f32 %v1528, %v1581
          %v1633 = vadd.f32 %v1529, %v1582
          %v1634 = vadd.f32 %v1530, %v1583
          %v1635 = vadd.f32 %v1531, %v1584
          %v1636 = vadd.f32 %v1532, %v1585
          %v1637 = vadd.f32 %v1533, %v1586
          %v1638 = vadd.f32 %v1534, %v1587
          %v1639 = vadd.f32 %v1535, %v1588
          %v1640 = vadd.f32 %v1536, %v1589
          %v1641 = vadd.f32 %v1537, %v1590
          %v1642 = vadd.f32 %v1538, %v1591
          %v1643 = vadd.f32 %v1539, %v1592
          %v1644 = vadd.f32 %v1540, %v1593
          %v1645 = vadd.f32 %v1541, %v1594
          %v1646 = vadd.f32 %v1542, %v1595
          %v1647 = vadd.f32 %v1543, %v1596
          %v1648 = vadd.f32 %v1544, %v1597
          %v1649 = vadd.f32 %v1545, %v1598
          %v1650 = vadd.f32 %v1546, %v1599
          %v1651 = vadd.f32 %v1547, %v1600
          %v1652 = vadd.f32 %v1548, %v1601
          %v1653 = vadd.f32 %v1549, %v1602
          %v1654 = vadd.f32 %v1550, %v1603
          %v1655 = vadd.f32 %v1551, %v1604
          %v1656 = vadd.f32 %v1552, %v1605
          %v1657 = vadd.f32 %v1553, %v1606
          %v1658 = vadd.f32 %v1554, %v1607
          %v1659 = vadd.f32 %v1555, %v1608
          %v1660 = vadd.f32 %v1556, %v1609
          %v1661 = vadd.f32 %v1557, %v1610
          %v1662 = vadd.f32 %v1558, %v1611
          %v1663 = vadd.f32 %v1559, %v1612
          %v1664 = vadd.f32 %v1560, %v1613
          %v1665 = vadd.f32 %v1561, %v1614
          %v1666 = vadd.f32 %v1562, %v1615
          %v1667 = vadd.f32 %v1563, %v1616
          %v1668 = vadd.f32 %v1564, %v1617
          %v1669 = vadd.f32 %v1565, %v1618
          %v1670 = vadd.f32 %v1566, %v1619
          %v1671 = vadd.f32 %v1567, %v1620
          %v1672 = vadd.f32 %v1568, %v1621
          %v1673 = vadd.f32 %v1569, %v1622
          %v1674 = vadd.f32 %v1570, %v1623
          %v1675 = vadd.f32 %v1571, %v1624
          %v1676 = vadd.f32 %v1572, %v1625
          %v1677 = vadd.f32 %v1573, %v1626
          %v1678 = vadd.f32 %v1574, %v1627
          %v1679 = vadd.f32 %v1575, %v1628
          %v1680 = vld [vmem:[#allocation12] sm:$0x7]
          %v1682 = vlaneseq
          %v1683 = vshrl.u32 %v1682, 7
          %v1684 = vsub.s32 0, %v1683
          %v1685 = vrot.slane %v1680, %v1684
          %v1686 = vlaneseq
          %v1687 = vshrl.u32 %v1686, 7
          %v1688 = vsub.s32 1, %v1687
          %v1689 = vrot.slane %v1680, %v1688
          %v1690 = vlaneseq
          %v1691 = vshrl.u32 %v1690, 7
          %v1692 = vsub.s32 2, %v1691
          %v1693 = vrot.slane %v1680, %v1692
          %v1697 = vadd.f32 %v1629, %v1685
          %v1698 = vadd.f32 %v1630, %v1689
          %v1699 = vadd.f32 %v1631, %v1693
          %v1700 = vadd.f32 %v1632, %v1685
          %v1701 = vadd.f32 %v1633, %v1689
          %v1702 = vadd.f32 %v1634, %v1693
          %v1703 = vadd.f32 %v1635, %v1685
          %v1704 = vadd.f32 %v1636, %v1689
          %v1705 = vadd.f32 %v1637, %v1693
          %v1706 = vadd.f32 %v1638, %v1685
          %v1707 = vadd.f32 %v1639, %v1689
          %v1708 = vadd.f32 %v1640, %v1693
          %v1709 = vadd.f32 %v1641, %v1685
          %v1710 = vadd.f32 %v1642, %v1689
          %v1711 = vadd.f32 %v1643, %v1693
          %v1712 = vadd.f32 %v1644, %v1685
          %v1713 = vadd.f32 %v1645, %v1689
          %v1714 = vadd.f32 %v1646, %v1693
          %v1715 = vadd.f32 %v1647, %v1685
          %v1716 = vadd.f32 %v1648, %v1689
          %v1717 = vadd.f32 %v1649, %v1693
          %v1718 = vadd.f32 %v1650, %v1685
          %v1719 = vadd.f32 %v1651, %v1689
          %v1720 = vadd.f32 %v1652, %v1693
          %v1721 = vadd.f32 %v1653, %v1685
          %v1722 = vadd.f32 %v1654, %v1689
          %v1723 = vadd.f32 %v1655, %v1693
          %v1724 = vadd.f32 %v1656, %v1685
          %v1725 = vadd.f32 %v1657, %v1689
          %v1726 = vadd.f32 %v1658, %v1693
          %v1727 = vadd.f32 %v1659, %v1685
          %v1728 = vadd.f32 %v1660, %v1689
          %v1729 = vadd.f32 %v1661, %v1693
          %v1730 = vadd.f32 %v1662, %v1685
          %v1731 = vadd.f32 %v1663, %v1689
          %v1732 = vadd.f32 %v1664, %v1693
          %v1733 = vadd.f32 %v1665, %v1685
          %v1734 = vadd.f32 %v1666, %v1689
          %v1735 = vadd.f32 %v1667, %v1693
          %v1736 = vadd.f32 %v1668, %v1685
          %v1737 = vadd.f32 %v1669, %v1689
          %v1738 = vadd.f32 %v1670, %v1693
          %v1739 = vadd.f32 %v1671, %v1685
          %v1740 = vadd.f32 %v1672, %v1689
          %v1741 = vadd.f32 %v1673, %v1693
          %v1742 = vadd.f32 %v1674, %v1685
          %v1743 = vadd.f32 %v1675, %v1689
          %v1744 = vadd.f32 %v1676, %v1693
          %v1745 = vadd.f32 %v1677, %v1685
          %v1746 = vadd.f32 %v1678, %v1689
          %v1747 = vadd.f32 %v1679, %v1693
          %1748 = vst [vmem:[%s421] sm:$0xff] %v1697
          %1749 = vst [vmem:[%s421 + $0x8] sm:$0xff] %v1698
          %1750 = vst [vmem:[%s421 + $0x10] sm:$0xff] %v1699
          %1751 = vst [vmem:[%s421 + $0x18] sm:$0xff] %v1700
          %1752 = vst [vmem:[%s421 + $0x20] sm:$0xff] %v1701
          %1753 = vst [vmem:[%s421 + $0x28] sm:$0xff] %v1702
          %1754 = vst [vmem:[%s421 + $0x30] sm:$0xff] %v1703
          %1755 = vst [vmem:[%s421 + $0x38] sm:$0xff] %v1704
          %1756 = vst [vmem:[%s421 + $0x40] sm:$0xff] %v1705
          %1757 = vst [vmem:[%s421 + $0x48] sm:$0xff] %v1706
          %1758 = vst [vmem:[%s421 + $0x50] sm:$0xff] %v1707
          %1759 = vst [vmem:[%s421 + $0x58] sm:$0xff] %v1708
          %1760 = vst [vmem:[%s421 + $0x60] sm:$0xff] %v1709
          %1761 = vst [vmem:[%s421 + $0x68] sm:$0xff] %v1710
          %1762 = vst [vmem:[%s421 + $0x70] sm:$0xff] %v1711
          %1763 = vst [vmem:[%s421 + $0x78] sm:$0xff] %v1712
          %1764 = vst [vmem:[%s421 + $0x80] sm:$0xff] %v1713
          %1765 = vst [vmem:[%s421 + $0x88] sm:$0xff] %v1714
          %1766 = vst [vmem:[%s421 + $0x90] sm:$0xff] %v1715
          %1767 = vst [vmem:[%s421 + $0x98] sm:$0xff] %v1716
          %1768 = vst [vmem:[%s421 + $0xa0] sm:$0xff] %v1717
          %1769 = vst [vmem:[%s421 + $0xa8] sm:$0xff] %v1718
          %1770 = vst [vmem:[%s421 + $0xb0] sm:$0xff] %v1719
          %1771 = vst [vmem:[%s421 + $0xb8] sm:$0xff] %v1720
          %1772 = vst [vmem:[%s421 + $0xc0] sm:$0xff] %v1721
          %1773 = vst [vmem:[%s421 + $0xc8] sm:$0xff] %v1722
          %1774 = vst [vmem:[%s421 + $0xd0] sm:$0xff] %v1723
          %1775 = vst [vmem:[%s421 + $0xd8] sm:$0xff] %v1724
          %1776 = vst [vmem:[%s421 + $0xe0] sm:$0xff] %v1725
          %1777 = vst [vmem:[%s421 + $0xe8] sm:$0xff] %v1726
          %1778 = vst [vmem:[%s421 + $0xf0] sm:$0xff] %v1727
          %1779 = vst [vmem:[%s421 + $0xf8] sm:$0xff] %v1728
          %1780 = vst [vmem:[%s421 + $0x100] sm:$0xff] %v1729
          %1781 = vst [vmem:[%s421 + $0x108] sm:$0xff] %v1730
          %1782 = vst [vmem:[%s421 + $0x110] sm:$0xff] %v1731
          %1783 = vst [vmem:[%s421 + $0x118] sm:$0xff] %v1732
          %1784 = vst [vmem:[%s421 + $0x120] sm:$0xff] %v1733
          %1785 = vst [vmem:[%s421 + $0x128] sm:$0xff] %v1734
          %1786 = vst [vmem:[%s421 + $0x130] sm:$0xff] %v1735
          %1787 = vst [vmem:[%s421 + $0x138] sm:$0xff] %v1736
          %1788 = vst [vmem:[%s421 + $0x140] sm:$0xff] %v1737
          %1789 = vst [vmem:[%s421 + $0x148] sm:$0xff] %v1738
          %1790 = vst [vmem:[%s421 + $0x150] sm:$0xff] %v1739
          %1791 = vst [vmem:[%s421 + $0x158] sm:$0xff] %v1740
          %1792 = vst [vmem:[%s421 + $0x160] sm:$0xff] %v1741
          %1793 = vst [vmem:[%s421 + $0x168] sm:$0xff] %v1742
          %1794 = vst [vmem:[%s421 + $0x170] sm:$0xff] %v1743
          %1795 = vst [vmem:[%s421 + $0x178] sm:$0xff] %v1744
          %1796 = vst [vmem:[%s421 + $0x180] sm:$0xff] %v1745
          %1797 = vst [vmem:[%s421 + $0x188] sm:$0xff] %v1746
          %1798 = vst [vmem:[%s421 + $0x190] sm:$0xff] %v1747
        $region72: #{tpu_custom_call.1} parent=43 // pred_fallthru
          _
        %s1799 = sand.u32 %s212, 1
        %s1800 = scalar_lea.sflag [#allocation6], %s1799
        %s1801 = sand.u32 %s212, 1
        %s1802 = smul.addr %s1801, 408
        %s1803 = scalar_lea.vmem [#allocation13], %s1802
        // Predicated region
        $region73: #{tpu_custom_call.1} parent=43 // pred_check
          %p1804 = pneg %p222
        $region74: #{tpu_custom_call.1} parent=43 // pred_check_branch
          %1806 = sbr.rel (%p1804) target = $region76
        $region75: #{tpu_custom_call.1} parent=43 // pred_region
          %s1807 = smul.u32 17, %s33
          %s1808 = smul.u32 3, %s34
          %s1810 = ssub.s32 6528, 6528
          %1811 = vsyncadd %s1800, %s1810
          %s1812 = smul.addr %s1807, 3
          %s1813 = sadd.s32 %s1808, %s1812
          %s1814 = smul.addr %s1813, 128
          %s1815 = scalar_lea.hbm %s6, %s1814
          %s1816 = sshll.u32 %s1803, 4
          %s1817 = int_to_ptr.vmem [resolvable:$true] %s1816
          %1822 = dma.vmem_to_hbm [thread:$0]  %s1817, 6528, %s1815, %s1800, 384, 384, 24
        $region76: #{tpu_custom_call.1} parent=43 // pred_fallthru
          _
      $region44: #{tpu_custom_call.1} parent=5 // pred_fallthru
        _
      %p1823 = scmp.le.s32.totalorder 2, %s23
      // Predicated region
      $region77: #{tpu_custom_call.1} parent=5 // pred_check
        %p1824 = pneg %p1823
      $region78: #{tpu_custom_call.1} parent=5 // pred_check_branch
        %1826 = sbr.rel (%p1824) target = $region80
      $region79: #{tpu_custom_call.1} parent=5 // pred_region
        %s1827 = ssub.s32 %s23, 2
        // Predicated region
        $region81: #{tpu_custom_call.1} parent=79 // pred_check
          %p1828 = pneg %p228
        $region82: #{tpu_custom_call.1} parent=79 // pred_check_branch
          %1830 = sbr.rel (%p1828) target = $region84
        $region83: #{tpu_custom_call.1} parent=79 // pred_region
          %s1831 = sand.u32 %s213, 1
          %s1832 = scalar_lea.sflag [#allocation6], %s1831
          %s1833 = sand.u32 %s213, 1
          %s1834 = smul.addr %s1833, 408
          %s1835 = scalar_lea.vmem [#allocation13], %s1834
          %1836 = dma.done %s1832, 6528
        $region84: #{tpu_custom_call.1} parent=79 // pred_fallthru
          _
      $region80: #{tpu_custom_call.1} parent=5 // pred_fallthru
        _
    $region6: #{tpu_custom_call.1} parent=1 // loop_footer
      %s27 = sadd.s32 1, %s23
    $region7: #{tpu_custom_call.1} parent=1 // loop_footer_branch
      %22 = sbr.rel target = $region3
    $region8: #{tpu_custom_call.1} parent=1 // loop_exit
      _
    %1837 = vsyncpa [#allocation5], 1
    %s1838 = scalar_lea.sflag [#allocation5], 1
    %1839 = vsyncpa %s1838, 1
    %1840 = vsyncpa [#allocation8], 1
    %s1841 = scalar_lea.sflag [#allocation8], 1
    %1842 = vsyncpa %s1841, 1
    %1843 = vsyncpa [#allocation11], 1
    %1844 = vsyncpa [#allocation6], 1
    %s1845 = scalar_lea.sflag [#allocation6], 1
    %1846 = vsyncpa %s1845, 1

</llo_original>
